<compile_context>
chip_gen: v7x
topology: tpu7x:2x2x1
jax: 0.10.0
libtpu: 0.0.40
codegen_flags: <defaults>
</compile_context>

<pallas_src>
import functools

import jax
import jax.numpy as jnp
from jax import lax
from jax.experimental import pallas as pl
from jax.experimental.pallas import tpu as pltpu


def _block_kernel(x_ref, wt1_ref, wt2_ref, b_ref, alpha_ref, o_ref, *,
                  matmul_dtype):
    # x_ref / o_ref: (BT, S, E) tile covering BT batch elements.
    BT, S, E = x_ref.shape
    x = x_ref[...]                                        # (BT, S, E) f32

    # L2 norm over the sequence axis (PyTorch dim=1), keepdim -> (BT, 1, E);
    # one reciprocal per column instead of S*E divides.
    norm = jnp.sqrt(jnp.sum(x * x, axis=1, keepdims=True))
    inv = 1.0 / (norm + 1e-6)
    xn = (x * inv).astype(matmul_dtype)

    # Batched gram = x_normed^T @ x_normed (contraction over S) -> (BT, E, E);
    # expressed via dot_general so no transpose is materialized on the XLU.
    gram = lax.dot_general(
        xn, xn,
        dimension_numbers=(((1,), (1,)), ((0,), (0,))),
        preferred_element_type=jnp.float32)
    # Batched matrix = x_normed @ gram -> (BT, S, E).
    mat = lax.dot_general(
        xn, gram.astype(matmul_dtype),
        dimension_numbers=(((2,), (1,)), ((0,), (0,))),
        preferred_element_type=jnp.float32)

    # Decoder Linear(2E -> E) on concat([x, matrix], -1) as a split matmul with
    # the sub-batch dim flattened into M (reshape is free when S % 8 == 0):
    #   cat @ W^T == x @ W[:, :E]^T + matrix @ W[:, E:]^T
    x2 = x.reshape(BT * S, E).astype(matmul_dtype)
    m2 = mat.reshape(BT * S, E).astype(matmul_dtype)
    y = (jnp.dot(x2, wt1_ref[...], preferred_element_type=jnp.float32)
         + jnp.dot(m2, wt2_ref[...], preferred_element_type=jnp.float32)
         + b_ref[...])

    # PReLU with a single scalar parameter, read from SMEM.
    alpha = alpha_ref[0]
    y = jnp.where(y > 0, y, alpha * y)

    # One contiguous store slab (no per-sub-batch sliced stores).
    o_ref[...] = y.reshape(BT, S, E)


def _device_config():
    """Returns (vmem_budget_bytes, mxu_target_rows, two_tensorcores)."""
    try:
        kind = jax.devices()[0].device_kind.lower()
    except Exception:
        kind = ""
    try:
        vmem_phys = int(pltpu.get_tpu_info().vmem_capacity_bytes)
    except Exception:
        vmem_phys = 128 * 1024 * 1024
    # The SAME number is used for BT sizing and as the compiler limit:
    # ~3/4 of physical VMEM -> ~96 MiB on 128 MiB parts (v5e/v6e), ~48 MiB on
    # v7x (64 MiB physical).
    budget = min((vmem_phys * 3) // 4, 100 * 1024 * 1024)
    target_rows = 128 if "v5" in kind else 256   # v6e/v7x MXUs are 2x256^2
    two_tc = "v7" in kind                        # only v7x has 2 TCs / chip
    return budget, target_rows, two_tc


def _choose_batch_tile(B, S, E, vmem_budget_bytes, *, target_rows,
                       two_tensorcores, single_buffered_weights):
    # f32 VMEM per sub-batch: double-buffered x-in and out blocks (4*S*E) plus
    # in-kernel live temporaries (x, xn, mat, y ~ 4*S*E; the reshapes are
    # layout-preserving) and the per-batch (E, E) gram.
    per_batch = 4 * (8 * S * E + E * E)
    w_copies = 2 if single_buffered_weights else 4   # wt1+wt2 x {1,2} buffers
    fixed = 4 * (w_copies * E * E + 2 * E)
    cap = max(1, (vmem_budget_bytes - fixed) // per_batch)
    bt = max(1, min(B, cap))
    if two_tensorcores and B > 1:
        # Keep >= 2 grid steps per TensorCore (>= 4 total when B allows) so
        # megacore sharding of the "parallel" axis feeds both cores, but never
        # shrink BT*S below the MXU-row target just to add steps.
        want = pl.cdiv(target_rows, S)
        min_steps = 4 if B >= 4 else 2
        split_bt = max(1, -(-B // min_steps))
        bt = min(bt, max(split_bt, min(B, want)))
    return bt


def bad_transformer_block_middle(x, w, b, alpha, *,
                                 use_bf16_matmul=False,
                                 vmem_budget_bytes=None):
    """x: (B, S, E); w: (E, 2E) PyTorch Linear weight; b: (E,); alpha: scalar.

    use_bf16_matmul feeds the MXU bf16 operands (f32 accumulation); it is
    opt-in because it relaxes the 1e-4 tolerance of the default f32 path.
    """
    B, S, E = x.shape
    assert w.shape == (E, 2 * E)
    assert b.shape == (E,)

    budget, target_rows, two_tc = _device_config()
    if vmem_budget_bytes is not None:
        budget = int(vmem_budget_bytes)

    matmul_dtype = jnp.bfloat16 if use_bf16_matmul else jnp.float32

    x = x.astype(jnp.float32)
    # Split/transpose the decoder weight once in plain-JAX glue.
    wt = jnp.transpose(w.astype(jnp.float32))            # (2E, E)
    wt1 = wt[:E].astype(matmul_dtype)                    # acts on x
    wt2 = wt[E:].astype(matmul_dtype)                    # acts on matrix
    b2d = b.astype(jnp.float32).reshape(1, E)
    alpha1d = jnp.asarray(alpha, jnp.float32).reshape(1)

    kernel = functools.partial(_block_kernel, matmul_dtype=matmul_dtype)

    def _call(single_buffered_weights):
        bt = _choose_batch_tile(
            B, S, E, budget, target_rows=target_rows, two_tensorcores=two_tc,
            single_buffered_weights=single_buffered_weights)
        steps = pl.cdiv(B, bt)
        b_pad = steps * bt
        xp = x if b_pad == B else jnp.pad(x, ((0, b_pad - B), (0, 0), (0, 0)))

        # Constant index maps: one VMEM copy of each weight tile is enough;
        # default double-buffering would waste 2x their footprint.
        wkw = {"pipeline_mode": pl.Buffered(1)} if single_buffered_weights else {}

        grid_spec = pltpu.PrefetchScalarGridSpec(
            num_scalar_prefetch=0,
            grid=(steps,),
            in_specs=[
                pl.BlockSpec((bt, S, E), lambda i: (i, 0, 0)),       # x tile
                pl.BlockSpec((E, E), lambda i: (0, 0), **wkw),       # W[:, :E]^T
                pl.BlockSpec((E, E), lambda i: (0, 0), **wkw),       # W[:, E:]^T
                pl.BlockSpec((1, E), lambda i: (0, 0), **wkw),       # bias
                pl.BlockSpec(memory_space=pltpu.MemorySpace.SMEM),   # PReLU alpha
            ],
            out_specs=pl.BlockSpec((bt, S, E), lambda i: (i, 0, 0)),
        )

        out = pl.pallas_call(
            kernel,
            out_shape=jax.ShapeDtypeStruct((b_pad, S, E), jnp.float32),
            grid_spec=grid_spec,
            compiler_params=pltpu.CompilerParams(
                dimension_semantics=("parallel",),
                vmem_limit_bytes=budget),
        )(xp, wt1, wt2, b2d, alpha1d)
        return out[:B] if b_pad != B else out

    try:
        return _call(single_buffered_weights=True)
    except Exception:
        # Fall back to default double-buffered weight tiles if this JAX build
        # rejects pipeline_mode=pl.Buffered(1) on pallas_call BlockSpecs.
        return _call(single_buffered_weights=False)


def _reference(x, w, b, alpha):
    hp = jax.lax.Precision.HIGHEST
    norm = jnp.linalg.norm(x, axis=1, keepdims=True)                 # (B, 1, E)
    xn = x / (norm + 1e-6)
    gram = jnp.einsum("bse,bsf->bef", xn, xn, precision=hp)          # (B, E, E)
    mat = jnp.einsum("bse,bef->bsf", xn, gram, precision=hp)         # (B, S, E)
    cat = jnp.concatenate([x, mat], axis=2)                          # (B, S, 2E)
    y = jnp.einsum("bsk,ek->bse", cat, w, precision=hp) + b          # (B, S, E)
    return jnp.where(y > 0, y, alpha * y)


if __name__ == "__main__":
    B, S, E = 2, 8, 32

    key = jax.random.PRNGKey(0)
    kx, kw, kb = jax.random.split(key, 3)

    x = jax.random.normal(kx, (B, S, E), dtype=jnp.float32)

    # Deterministic parameter init (uniform in [-1/sqrt(2E), 1/sqrt(2E)],
    # mirroring nn.Linear's default bound; PReLU alpha = 0.25 default).
    bound = 1.0 / jnp.sqrt(jnp.float32(2 * E))
    w = jax.random.uniform(kw, (E, 2 * E), jnp.float32, -bound, bound)
    b = jax.random.uniform(kb, (E,), jnp.float32, -bound, bound)
    alpha = jnp.float32(0.25)

    out = bad_transformer_block_middle(x, w, b, alpha)
    out = jax.block_until_ready(out)

    ref = _reference(x, w, b, alpha)
    assert out.shape == (B, S, E)
    assert jnp.allclose(out, ref, atol=1e-4, rtol=1e-4), "mismatch vs reference"

    print("KERNEL_OK")
</pallas_src>

<mosaic_0001>
module attributes {stable_mosaic.version = 11 : i64} {
  func.func @_block_kernel(%arg0: i32, %arg1: memref<2x8x32xf32, #tpu.memory_space<vmem>>, %arg2: memref<32x32xf32, #tpu.memory_space<vmem>>, %arg3: memref<32x32xf32, #tpu.memory_space<vmem>>, %arg4: memref<1x32xf32, #tpu.memory_space<vmem>>, %arg5: memref<1xf32, #tpu.memory_space<smem>>, %arg6: memref<2x8x32xf32, #tpu.memory_space<vmem>>) attributes {dimension_semantics = [#tpu.dimension_semantics<parallel>], iteration_bounds = array<i64: 1>, scalar_prefetch = 0 : i64, scratch_operands = 0 : i64, tpu.core_type = #tpu.core_type<tc>, window_params = [{transform_indices = @transform_0, window_bounds = array<i64: 2, 8, 32>}, {pipeline_mode = #tpu.pipeline_mode<synchronous>, transform_indices = @transform_1, window_bounds = array<i64: 32, 32>}, {pipeline_mode = #tpu.pipeline_mode<synchronous>, transform_indices = @transform_2, window_bounds = array<i64: 32, 32>}, {pipeline_mode = #tpu.pipeline_mode<synchronous>, transform_indices = @transform_3, window_bounds = array<i64: 1, 32>}, {transform_indices = @transform_4, window_bounds = array<i64: 1>}, {transform_indices = @transform_5, window_bounds = array<i64: 2, 8, 32>}]} {
    %c0 = arith.constant 0 : index
    %c0_0 = arith.constant 0 : index
    %c0_1 = arith.constant 0 : index
    %0 = vector.load %arg1[%c0, %c0_0, %c0_1] : memref<2x8x32xf32, #tpu.memory_space<vmem>>, vector<2x8x32xf32>
    %1 = arith.mulf %0, %0 : vector<2x8x32xf32>
    %cst = arith.constant dense<0.000000e+00> : vector<2x32xf32>
    %2 = vector.multi_reduction <add>, %1, %cst [1] : vector<2x8x32xf32> to vector<2x32xf32>
    %3 = vector.shape_cast %2 : vector<2x32xf32> to vector<2x1x32xf32>
    %4 = math.sqrt %3 : vector<2x1x32xf32>
    %cst_2 = arith.constant 9.99999997E-7 : f32
    %5 = vector.broadcast %cst_2 : f32 to vector<2x1x32xf32>
    %6 = arith.addf %4, %5 : vector<2x1x32xf32>
    %cst_3 = arith.constant 1.000000e+00 : f32
    %7 = vector.broadcast %cst_3 : f32 to vector<2x1x32xf32>
    %8 = arith.divf %7, %6 : vector<2x1x32xf32>
    %9 = vector.broadcast %8 : vector<2x1x32xf32> to vector<2x8x32xf32>
    %10 = arith.mulf %0, %9 : vector<2x8x32xf32>
    %cst_4 = arith.constant dense<0.000000e+00> : vector<2x32x32xf32>
    %11 = tpu.matmul %10, %10, %cst_4 {dimension_numbers = #tpu.dot_dimension_numbers<[1], [1], [2], [2], [0, 0, 0, 2, 1, 2], [0], [0]>} : vector<2x8x32xf32>, vector<2x8x32xf32>, vector<2x32x32xf32> -> vector<2x32x32xf32>
    %cst_5 = arith.constant dense<0.000000e+00> : vector<2x8x32xf32>
    %12 = tpu.matmul %10, %11, %cst_5 {dimension_numbers = #tpu.dot_dimension_numbers<[2], [1], [1], [2], [0, 0, 0, 1, 1, 2], [0], [0]>} : vector<2x8x32xf32>, vector<2x32x32xf32>, vector<2x8x32xf32> -> vector<2x8x32xf32>
    %13 = vector.shape_cast %0 : vector<2x8x32xf32> to vector<16x32xf32>
    %14 = vector.shape_cast %12 : vector<2x8x32xf32> to vector<16x32xf32>
    %c0_6 = arith.constant 0 : index
    %c0_7 = arith.constant 0 : index
    %15 = vector.load %arg2[%c0_6, %c0_7] : memref<32x32xf32, #tpu.memory_space<vmem>>, vector<32x32xf32>
    %cst_8 = arith.constant dense<0.000000e+00> : vector<16x32xf32>
    %16 = tpu.matmul %13, %15, %cst_8 {dimension_numbers = #tpu.dot_dimension_numbers<[1], [0], [0], [1], [0, 0, 1, 1], [], []>} : vector<16x32xf32>, vector<32x32xf32>, vector<16x32xf32> -> vector<16x32xf32>
    %c0_9 = arith.constant 0 : index
    %c0_10 = arith.constant 0 : index
    %17 = vector.load %arg3[%c0_9, %c0_10] : memref<32x32xf32, #tpu.memory_space<vmem>>, vector<32x32xf32>
    %cst_11 = arith.constant dense<0.000000e+00> : vector<16x32xf32>
    %18 = tpu.matmul %14, %17, %cst_11 {dimension_numbers = #tpu.dot_dimension_numbers<[1], [0], [0], [1], [0, 0, 1, 1], [], []>} : vector<16x32xf32>, vector<32x32xf32>, vector<16x32xf32> -> vector<16x32xf32>
    %19 = arith.addf %16, %18 : vector<16x32xf32>
    %c0_12 = arith.constant 0 : index
    %c0_13 = arith.constant 0 : index
    %20 = vector.load %arg4[%c0_12, %c0_13] : memref<1x32xf32, #tpu.memory_space<vmem>>, vector<1x32xf32>
    %21 = vector.broadcast %20 : vector<1x32xf32> to vector<16x32xf32>
    %22 = arith.addf %19, %21 : vector<16x32xf32>
    %c0_14 = arith.constant 0 : index
    %23 = memref.load %arg5[%c0_14] : memref<1xf32, #tpu.memory_space<smem>>
    %cst_15 = arith.constant 0.000000e+00 : f32
    %24 = vector.broadcast %cst_15 : f32 to vector<16x32xf32>
    %25 = arith.cmpf ogt, %22, %24 : vector<16x32xf32>
    %26 = vector.broadcast %23 : f32 to vector<16x32xf32>
    %27 = arith.mulf %26, %22 : vector<16x32xf32>
    %28 = arith.select %25, %22, %27 : vector<16x32xi1>, vector<16x32xf32>
    %29 = vector.shape_cast %28 : vector<16x32xf32> to vector<2x8x32xf32>
    %c0_16 = arith.constant 0 : index
    %c0_17 = arith.constant 0 : index
    %c0_18 = arith.constant 0 : index
    %30 = vector.load %arg6[%c0_16, %c0_17, %c0_18] : memref<2x8x32xf32, #tpu.memory_space<vmem>>, vector<2x8x32xf32>
    tpu.vector_store %arg6[%c0_16, %c0_17, %c0_18], %29 {strides = array<i32>} : memref<2x8x32xf32, #tpu.memory_space<vmem>>, vector<2x8x32xf32>,
    return
  }
  func.func @transform_0(%arg0: i32) -> (i32, i32, i32) {
    %c0_i32 = arith.constant 0 : i32
    %c0_i32_0 = arith.constant 0 : i32
    %c0_i32_1 = arith.constant 0 : i32
    return %arg0, %c0_i32, %c0_i32_0 : i32, i32, i32
  }
  func.func @transform_1(%arg0: i32) -> (i32, i32) {
    %c0_i32 = arith.constant 0 : i32
    %c0_i32_0 = arith.constant 0 : i32
    %c0_i32_1 = arith.constant 0 : i32
    return %c0_i32, %c0_i32_0 : i32, i32
  }
  func.func @transform_2(%arg0: i32) -> (i32, i32) {
    %c0_i32 = arith.constant 0 : i32
    %c0_i32_0 = arith.constant 0 : i32
    %c0_i32_1 = arith.constant 0 : i32
    return %c0_i32, %c0_i32_0 : i32, i32
  }
  func.func @transform_3(%arg0: i32) -> (i32, i32) {
    %c0_i32 = arith.constant 0 : i32
    %c0_i32_0 = arith.constant 0 : i32
    %c0_i32_1 = arith.constant 0 : i32
    return %c0_i32, %c0_i32_0 : i32, i32
  }
  func.func @transform_4(%arg0: i32) -> i32 {
    %c0_i32 = arith.constant 0 : i32
    %c0_i32_0 = arith.constant 0 : i32
    return %c0_i32 : i32
  }
  func.func @transform_5(%arg0: i32) -> (i32, i32, i32) {
    %c0_i32 = arith.constant 0 : i32
    %c0_i32_0 = arith.constant 0 : i32
    %c0_i32_1 = arith.constant 0 : i32
    return %arg0, %c0_i32, %c0_i32_0 : i32, i32, i32
  }
}

module attributes {stable_mosaic.version = 11 : i64} {
  func.func @_block_kernel(%arg0: i32, %arg1: memref<2x8x32xf32, #tpu.memory_space<vmem>>, %arg2: memref<32x32xf32, #tpu.memory_space<vmem>>, %arg3: memref<32x32xf32, #tpu.memory_space<vmem>>, %arg4: memref<1x32xf32, #tpu.memory_space<vmem>>, %arg5: memref<1xf32, #tpu.memory_space<smem>>, %arg6: memref<2x8x32xf32, #tpu.memory_space<vmem>>) attributes {dimension_semantics = [#tpu.dimension_semantics<parallel>], iteration_bounds = array<i64: 1>, scalar_prefetch = 0 : i64, scratch_operands = 0 : i64, tpu.core_type = #tpu.core_type<tc>, window_params = [{transform_indices = @transform_0, window_bounds = array<i64: 2, 8, 32>}, {pipeline_mode = #tpu.pipeline_mode<synchronous>, transform_indices = @transform_1, window_bounds = array<i64: 32, 32>}, {pipeline_mode = #tpu.pipeline_mode<synchronous>, transform_indices = @transform_2, window_bounds = array<i64: 32, 32>}, {pipeline_mode = #tpu.pipeline_mode<synchronous>, transform_indices = @transform_3, window_bounds = array<i64: 1, 32>}, {transform_indices = @transform_4, window_bounds = array<i64: 1>}, {transform_indices = @transform_5, window_bounds = array<i64: 2, 8, 32>}]} {
    %c0 = arith.constant 0 : index
    %c0_0 = arith.constant 0 : index
    %c0_1 = arith.constant 0 : index
    %0 = vector.load %arg1[%c0, %c0_0, %c0_1] : memref<2x8x32xf32, #tpu.memory_space<vmem>>, vector<2x8x32xf32>
    %1 = arith.mulf %0, %0 : vector<2x8x32xf32>
    %cst = arith.constant dense<0.000000e+00> : vector<2x32xf32>
    %2 = vector.multi_reduction <add>, %1, %cst [1] : vector<2x8x32xf32> to vector<2x32xf32>
    %3 = vector.shape_cast %2 : vector<2x32xf32> to vector<2x1x32xf32>
    %4 = math.sqrt %3 : vector<2x1x32xf32>
    %cst_2 = arith.constant 9.99999997E-7 : f32
    %5 = vector.broadcast %cst_2 : f32 to vector<2x1x32xf32>
    %6 = arith.addf %4, %5 : vector<2x1x32xf32>
    %cst_3 = arith.constant 1.000000e+00 : f32
    %7 = vector.broadcast %cst_3 : f32 to vector<2x1x32xf32>
    %8 = arith.divf %7, %6 : vector<2x1x32xf32>
    %9 = vector.broadcast %8 : vector<2x1x32xf32> to vector<2x8x32xf32>
    %10 = arith.mulf %0, %9 : vector<2x8x32xf32>
    %cst_4 = arith.constant dense<0.000000e+00> : vector<2x32x32xf32>
    %11 = tpu.matmul %10, %10, %cst_4 {dimension_numbers = #tpu.dot_dimension_numbers<[1], [1], [2], [2], [0, 0, 0, 2, 1, 2], [0], [0]>} : vector<2x8x32xf32>, vector<2x8x32xf32>, vector<2x32x32xf32> -> vector<2x32x32xf32>
    %cst_5 = arith.constant dense<0.000000e+00> : vector<2x8x32xf32>
    %12 = tpu.matmul %10, %11, %cst_5 {dimension_numbers = #tpu.dot_dimension_numbers<[2], [1], [1], [2], [0, 0, 0, 1, 1, 2], [0], [0]>} : vector<2x8x32xf32>, vector<2x32x32xf32>, vector<2x8x32xf32> -> vector<2x8x32xf32>
    %13 = vector.shape_cast %0 : vector<2x8x32xf32> to vector<16x32xf32>
    %14 = vector.shape_cast %12 : vector<2x8x32xf32> to vector<16x32xf32>
    %c0_6 = arith.constant 0 : index
    %c0_7 = arith.constant 0 : index
    %15 = vector.load %arg2[%c0_6, %c0_7] : memref<32x32xf32, #tpu.memory_space<vmem>>, vector<32x32xf32>
    %cst_8 = arith.constant dense<0.000000e+00> : vector<16x32xf32>
    %16 = tpu.matmul %13, %15, %cst_8 {dimension_numbers = #tpu.dot_dimension_numbers<[1], [0], [0], [1], [0, 0, 1, 1], [], []>} : vector<16x32xf32>, vector<32x32xf32>, vector<16x32xf32> -> vector<16x32xf32>
    %c0_9 = arith.constant 0 : index
    %c0_10 = arith.constant 0 : index
    %17 = vector.load %arg3[%c0_9, %c0_10] : memref<32x32xf32, #tpu.memory_space<vmem>>, vector<32x32xf32>
    %cst_11 = arith.constant dense<0.000000e+00> : vector<16x32xf32>
    %18 = tpu.matmul %14, %17, %cst_11 {dimension_numbers = #tpu.dot_dimension_numbers<[1], [0], [0], [1], [0, 0, 1, 1], [], []>} : vector<16x32xf32>, vector<32x32xf32>, vector<16x32xf32> -> vector<16x32xf32>
    %19 = arith.addf %16, %18 : vector<16x32xf32>
    %c0_12 = arith.constant 0 : index
    %c0_13 = arith.constant 0 : index
    %20 = vector.load %arg4[%c0_12, %c0_13] : memref<1x32xf32, #tpu.memory_space<vmem>>, vector<1x32xf32>
    %21 = vector.broadcast %20 : vector<1x32xf32> to vector<16x32xf32>
    %22 = arith.addf %19, %21 : vector<16x32xf32>
    %c0_14 = arith.constant 0 : index
    %23 = memref.load %arg5[%c0_14] : memref<1xf32, #tpu.memory_space<smem>>
    %cst_15 = arith.constant 0.000000e+00 : f32
    %24 = vector.broadcast %cst_15 : f32 to vector<16x32xf32>
    %25 = arith.cmpf ogt, %22, %24 : vector<16x32xf32>
    %26 = vector.broadcast %23 : f32 to vector<16x32xf32>
    %27 = arith.mulf %26, %22 : vector<16x32xf32>
    %28 = arith.select %25, %22, %27 : vector<16x32xi1>, vector<16x32xf32>
    %29 = vector.shape_cast %28 : vector<16x32xf32> to vector<2x8x32xf32>
    %c0_16 = arith.constant 0 : index
    %c0_17 = arith.constant 0 : index
    %c0_18 = arith.constant 0 : index
    %30 = vector.load %arg6[%c0_16, %c0_17, %c0_18] : memref<2x8x32xf32, #tpu.memory_space<vmem>>, vector<2x8x32xf32>
    tpu.vector_store %arg6[%c0_16, %c0_17, %c0_18], %29 {strides = array<i32>} : memref<2x8x32xf32, #tpu.memory_space<vmem>>, vector<2x8x32xf32>,
    return
  }
  func.func @transform_0(%arg0: i32) -> (i32, i32, i32) {
    %c0_i32 = arith.constant 0 : i32
    %c0_i32_0 = arith.constant 0 : i32
    %c0_i32_1 = arith.constant 0 : i32
    return %arg0, %c0_i32, %c0_i32_0 : i32, i32, i32
  }
  func.func @transform_1(%arg0: i32) -> (i32, i32) {
    %c0_i32 = arith.constant 0 : i32
    %c0_i32_0 = arith.constant 0 : i32
    %c0_i32_1 = arith.constant 0 : i32
    return %c0_i32, %c0_i32_0 : i32, i32
  }
  func.func @transform_2(%arg0: i32) -> (i32, i32) {
    %c0_i32 = arith.constant 0 : i32
    %c0_i32_0 = arith.constant 0 : i32
    %c0_i32_1 = arith.constant 0 : i32
    return %c0_i32, %c0_i32_0 : i32, i32
  }
  func.func @transform_3(%arg0: i32) -> (i32, i32) {
    %c0_i32 = arith.constant 0 : i32
    %c0_i32_0 = arith.constant 0 : i32
    %c0_i32_1 = arith.constant 0 : i32
    return %c0_i32, %c0_i32_0 : i32, i32
  }
  func.func @transform_4(%arg0: i32) -> i32 {
    %c0_i32 = arith.constant 0 : i32
    %c0_i32_0 = arith.constant 0 : i32
    return %c0_i32 : i32
  }
  func.func @transform_5(%arg0: i32) -> (i32, i32, i32) {
    %c0_i32 = arith.constant 0 : i32
    %c0_i32_0 = arith.constant 0 : i32
    %c0_i32_1 = arith.constant 0 : i32
    return %arg0, %c0_i32, %c0_i32_0 : i32, i32, i32
  }
}

</mosaic_0001>

<llo_original>
// kernel: tpu_custom_call.1
$region0: #{tpu_custom_call.1}
  #allocation0 [shape = 'u32[]', space=smem, size = 0x4, offset = 0x4, fixed_abs, tag = 'smem constant byte address 0x4 - core index']
  #allocation1 [shape = 'u32[144,128]{1,0:T(1,128)}', space=vmem, size = 0x12000, scoped, tag = 'internal scratch']
  #allocation2 [shape = 'f32[1]{0:T(128)S(6)}', space=smem, size = 0x200, scoped, tag = 'scoped memory for tpu_custom_call.1']
  %s0 = inlined_call_operand.hbm [shape: f32[2,8,32], index: 0, kind: input, shape index: {}]
  %s1 = inlined_call_operand.hbm [shape: f32[32,32], index: 1, kind: input, shape index: {}]
  %s2 = inlined_call_operand.hbm [shape: f32[32,32], index: 2, kind: input, shape index: {}]
  %s3 = inlined_call_operand.hbm [shape: f32[1,32], index: 3, kind: input, shape index: {}]
  %s4 = inlined_call_operand.<no memory space> [shape: f32[1], index: 4, kind: input, shape index: {}]
  %s5 = inlined_call_operand.hbm [shape: f32[2,8,32], index: 5, kind: output, shape index: {}]
  %s6 = sld [smem:[#allocation0]]
  $region46: #{tpu_custom_call.1} parent=0
    _
  %s8 = ssub.s32 1, %s6
  %s9 = scalar_select 0, %s8, %s6
  %10 = sst [smem:[#allocation2]] %s4
  $region1: #{tpu_custom_call.1} parent=0
    #allocation3 [shape = 'u8[8192]{0}', space=vmem, size = 0x2000, scoped, tag = 'input window, operand 0, single buffered']
    #allocation4 [shape = 's32[1]{0}', space=sflag, size = 0x4, scoped, tag = 'scoped memory for tpu_custom_call.1']
    #allocation5 [shape = 's32[1]{0}', space=sflag, size = 0x4, scoped, tag = 'scoped memory for tpu_custom_call.1']
    #allocation6 [shape = 'u8[16384]{0}', space=vmem, size = 0x4000, scoped, tag = 'input window, operand 1, single buffered']
    #allocation7 [shape = 's32[1]{0}', space=sflag, size = 0x4, scoped, tag = 'scoped memory for tpu_custom_call.1']
    #allocation8 [shape = 'u8[16384]{0}', space=vmem, size = 0x4000, scoped, tag = 'input window, operand 2, single buffered']
    #allocation9 [shape = 'u8[512]{0}', space=vmem, size = 0x400, scoped, tag = 'input window, operand 3, single buffered']
    #allocation10 [shape = 's32[1]{0}', space=sflag, size = 0x4, scoped, tag = 'scoped memory for tpu_custom_call.1']
    #allocation11 [shape = 'u8[8192]{0}', space=vmem, size = 0x2000, scoped, tag = 'output window, operand 0, single buffered']
    %11 = vsyncpa [#allocation4], 0
    %12 = vsyncpa [#allocation7], 0
    %13 = vsyncpa [#allocation10], 0
    %14 = vsyncpa [#allocation5], 0
    // Predicated region
    $region2: #{tpu_custom_call.1} parent=1 // pred_check
      _
    $region3: #{tpu_custom_call.1} parent=1 // pred_check_branch
      %16 = sbr.rel (0) target = $region5
    $region4: #{tpu_custom_call.1} parent=1 // pred_region
      %s18 = ssub.s32 256, 256
      %19 = vsyncadd [#allocation4], %s18
      %s20 = sshll.u32 [#allocation3], 4
      %s21 = int_to_ptr.vmem [resolvable:$true] %s20
      %26 = dma.hbm_to_vmem [thread:$0]  %s0, 256, %s21, [#allocation4], 128, 128, 8
    $region5: #{tpu_custom_call.1} parent=1 // pred_fallthru
      _
    // Predicated region
    $region6: #{tpu_custom_call.1} parent=1 // pred_check
      _
    $region7: #{tpu_custom_call.1} parent=1 // pred_check_branch
      %28 = sbr.rel (0) target = $region9
    $region8: #{tpu_custom_call.1} parent=1 // pred_region
      %s30 = ssub.s32 512, 512
      %31 = vsyncadd [#allocation7], %s30
      %s32 = sshll.u32 [#allocation6], 4
      %s33 = int_to_ptr.vmem [resolvable:$true] %s32
      %38 = dma.hbm_to_vmem [thread:$0]  %s1, 512, %s33, [#allocation7], 128, 128, 8
    $region9: #{tpu_custom_call.1} parent=1 // pred_fallthru
      _
    // Predicated region
    $region10: #{tpu_custom_call.1} parent=1 // pred_check
      _
    $region11: #{tpu_custom_call.1} parent=1 // pred_check_branch
      %40 = sbr.rel (0) target = $region13
    $region12: #{tpu_custom_call.1} parent=1 // pred_region
      %s42 = ssub.s32 512, 512
      %43 = vsyncadd [#allocation7], %s42
      %s44 = sshll.u32 [#allocation8], 4
      %s45 = int_to_ptr.vmem [resolvable:$true] %s44
      %50 = dma.hbm_to_vmem [thread:$0]  %s2, 512, %s45, [#allocation7], 128, 128, 8
    $region13: #{tpu_custom_call.1} parent=1 // pred_fallthru
      _
    // Predicated region
    $region14: #{tpu_custom_call.1} parent=1 // pred_check
      _
    $region15: #{tpu_custom_call.1} parent=1 // pred_check_branch
      %52 = sbr.rel (0) target = $region17
    $region16: #{tpu_custom_call.1} parent=1 // pred_region
      %s54 = ssub.s32 16, 16
      %55 = vsyncadd [#allocation10], %s54
      %s57 = sshll.u32 [#allocation9], 4
      %s58 = int_to_ptr.vmem [resolvable:$true] %s57
      %60 = dma.hbm_to_vmem [thread:$0]  %s3, 16, %s58, [#allocation10]
    $region17: #{tpu_custom_call.1} parent=1 // pred_fallthru
      _
    // Predicated region
    $region18: #{tpu_custom_call.1} parent=1 // pred_check
      _
    $region19: #{tpu_custom_call.1} parent=1 // pred_check_branch
      %62 = sbr.rel (0) target = $region21
    $region20: #{tpu_custom_call.1} parent=1 // pred_region
      _
    $region21: #{tpu_custom_call.1} parent=1 // pred_fallthru
      _
    // Predicated region
    $region22: #{tpu_custom_call.1} parent=1 // pred_check
      _
    $region23: #{tpu_custom_call.1} parent=1 // pred_check_branch
      %64 = sbr.rel (0) target = $region25
    $region24: #{tpu_custom_call.1} parent=1 // pred_region
      %65 = dma.done [#allocation4], 256
    $region25: #{tpu_custom_call.1} parent=1 // pred_fallthru
      _
    // Predicated region
    $region26: #{tpu_custom_call.1} parent=1 // pred_check
      _
    $region27: #{tpu_custom_call.1} parent=1 // pred_check_branch
      %67 = sbr.rel (0) target = $region29
    $region28: #{tpu_custom_call.1} parent=1 // pred_region
      %68 = dma.done [#allocation7], 512
    $region29: #{tpu_custom_call.1} parent=1 // pred_fallthru
      _
    // Predicated region
    $region30: #{tpu_custom_call.1} parent=1 // pred_check
      _
    $region31: #{tpu_custom_call.1} parent=1 // pred_check_branch
      %70 = sbr.rel (0) target = $region33
    $region32: #{tpu_custom_call.1} parent=1 // pred_region
      %71 = dma.done [#allocation7], 512
    $region33: #{tpu_custom_call.1} parent=1 // pred_fallthru
      _
    // Predicated region
    $region34: #{tpu_custom_call.1} parent=1 // pred_check
      _
    $region35: #{tpu_custom_call.1} parent=1 // pred_check_branch
      %73 = sbr.rel (0) target = $region37
    $region36: #{tpu_custom_call.1} parent=1 // pred_region
      %74 = dma.done [#allocation10], 16
    $region37: #{tpu_custom_call.1} parent=1 // pred_fallthru
      _
    %v75 = vld [vmem:[#allocation3] sm:$0xff]
    %v76 = vld [vmem:[#allocation3 + $0x8] sm:$0xff]
    %v77 = vmul.f32 %v75, %v75
    %v78 = vmul.f32 %v76, %v76
    %vm79 = vcmask 261120
    %v80 = vsel %vm79, %v77, 0.0
    %v81 = vrot.slane %v80, 4
    %v82 = vadd.f32 %v80, %v81
    %v83 = vrot.slane %v82, 2
    %v84 = vadd.f32 %v82, %v83
    %v85 = vrot.slane %v84, 1
    %v86 = vadd.f32 %v84, %v85
    %v87 = vsel %vm79, %v78, 0.0
    %v88 = vrot.slane %v87, 4
    %v89 = vadd.f32 %v87, %v88
    %v90 = vrot.slane %v89, 2
    %v91 = vadd.f32 %v89, %v90
    %v92 = vrot.slane %v91, 1
    %v93 = vadd.f32 %v91, %v92
    %v94 = vrsqrt.pop %v86
    %v95 = vmul.f32 %v86, %v94
    %vm96 = vcmp.eq.f32.partialorder %v86, inf
    %v97 = vsel %vm96, %v86, %v95
    %vm98 = vcmp.eq.f32.partialorder %v86, 0.0
    %v99 = vand.u32 %v86, 2147483648
    %v100 = vsel %vm98, %v99, %v97
    %v101 = vrsqrt.pop %v93
    %v102 = vmul.f32 %v93, %v101
    %vm103 = vcmp.eq.f32.partialorder %v93, inf
    %v104 = vsel %vm103, %v93, %v102
    %vm105 = vcmp.eq.f32.partialorder %v93, 0.0
    %v106 = vand.u32 %v93, 2147483648
    %v107 = vsel %vm105, %v106, %v104
    %v108 = vadd.f32 %v100, 1e-06
    %v109 = vadd.f32 %v107, 1e-06
    %v110 = vrcp.pop %v108
    %v111 = vmul.f32 1.0, %v110
    %v112 = vrcp.pop %v109
    %v113 = vmul.f32 1.0, %v112
    %v114 = vmul.f32 %v75, %v111
    %v115 = vmul.f32 %v76, %v113
    %116 = vxpose.xlu0.b32.start [1/16] %v114, 128
    %117 = vxpose.xlu0.b32.cont [2/16] 0.0, 128
    %118 = vxpose.xlu0.b32.cont [3/16] 0.0, 128
    %119 = vxpose.xlu0.b32.cont [4/16] 0.0, 128
    %120 = vxpose.xlu0.b32.cont [5/16] 0.0, 128
    %121 = vxpose.xlu0.b32.cont [6/16] 0.0, 128
    %122 = vxpose.xlu0.b32.cont [7/16] 0.0, 128
    %123 = vxpose.xlu0.b32.cont [8/16] 0.0, 128
    %124 = vxpose.xlu0.b32.cont [9/16] 0.0, 128
    %125 = vxpose.xlu0.b32.cont [10/16] 0.0, 128
    %126 = vxpose.xlu0.b32.cont [11/16] 0.0, 128
    %127 = vxpose.xlu0.b32.cont [12/16] 0.0, 128
    %128 = vxpose.xlu0.b32.cont [13/16] 0.0, 128
    %129 = vxpose.xlu0.b32.cont [14/16] 0.0, 128
    %130 = vxpose.xlu0.b32.cont [15/16] 0.0, 128
    %131 = vxpose.xlu0.b32.end [16/16] 0.0, 128
    %v132 = vpop.trf.xlu0
    %v133 = vpop.trf.xlu0
    %v134 = vpop.trf.xlu0
    %v135 = vpop.trf.xlu0
    %v136 = vpop.trf.xlu0
    %v137 = vpop.trf.xlu0
    %v138 = vpop.trf.xlu0
    %v139 = vpop.trf.xlu0
    %v140 = vpop.trf.xlu0
    %v141 = vpop.trf.xlu0
    %v142 = vpop.trf.xlu0
    %v143 = vpop.trf.xlu0
    %v144 = vpop.trf.xlu0
    %v145 = vpop.trf.xlu0
    %v146 = vpop.trf.xlu0
    %v147 = vpop.trf.xlu0
    %vm148 = vcmask 64512
    %v150 = vsel %vm148, %v132, 0
    %v153 = vsel %vm148, %v133, 0
    %v156 = vsel %vm148, %v134, 0
    %v159 = vsel %vm148, %v135, 0
    %161 = vmatprep.subr.mxu0 0.0
    %162 = vmatpush1.msra.mxu0 %v114
    %163 = vmatprep.subr.mxu0 0.0
    %164 = vmatpush1.msra.mxu0 0.0
    %165 = vmatprep.subr.mxu0 0.0
    %166 = vmatpush1.msra.mxu0 0.0
    %167 = vmatprep.subr.mxu0 0.0
    %168 = vmatpush1.msra.mxu0 0.0
    %169 = vmatprep.subr.mxu0 0.0
    %170 = vmatpush1.msra.mxu0 0.0
    %171 = vmatprep.subr.mxu0 0.0
    %172 = vmatpush1.msra.mxu0 0.0
    %173 = vmatprep.subr.mxu0 0.0
    %174 = vmatpush1.msra.mxu0 0.0
    %175 = vmatprep.subr.mxu0 0.0
    %176 = vmatpush1.msra.mxu0 0.0
    %177 = vmatprep.subr.mxu0 0.0
    %178 = vmatpush1.msra.mxu0 0.0
    %179 = vmatprep.subr.mxu0 0.0
    %180 = vmatpush1.msra.mxu0 0.0
    %181 = vmatprep.subr.mxu0 0.0
    %182 = vmatpush1.msra.mxu0 0.0
    %183 = vmatprep.subr.mxu0 0.0
    %184 = vmatpush1.msra.mxu0 0.0
    %185 = vmatprep.subr.mxu0 0.0
    %186 = vmatpush1.msra.mxu0 0.0
    %187 = vmatprep.subr.mxu0 0.0
    %188 = vmatpush1.msra.mxu0 0.0
    %189 = vmatprep.subr.mxu0 0.0
    %190 = vmatpush1.msra.mxu0 0.0
    %191 = vmatprep.subr.mxu0 0.0
    %192 = vmatpush1.msra.mxu0 0.0
    %193 = vmatprep.subr.mxu0 0.0
    %194 = vmatpush1.msra.mxu0 0.0
    %195 = vmatprep.subr.mxu0 0.0
    %196 = vmatpush1.msra.mxu0 0.0
    %197 = vmatprep.subr.mxu0 0.0
    %198 = vmatpush1.msra.mxu0 0.0
    %199 = vmatprep.subr.mxu0 0.0
    %200 = vmatpush1.msra.mxu0 0.0
    %201 = vmatprep.subr.mxu0 0.0
    %202 = vmatpush1.msra.mxu0 0.0
    %203 = vmatprep.subr.mxu0 0.0
    %204 = vmatpush1.msra.mxu0 0.0
    %205 = vmatprep.subr.mxu0 0.0
    %206 = vmatpush1.msra.mxu0 0.0
    %207 = vmatprep.subr.mxu0 0.0
    %208 = vmatpush1.msra.mxu0 0.0
    %209 = vmatprep.subr.mxu0 0.0
    %210 = vmatpush1.msra.mxu0 0.0
    %211 = vmatprep.subr.mxu0 0.0
    %212 = vmatpush1.msra.mxu0 0.0
    %213 = vmatprep.subr.mxu0 0.0
    %214 = vmatpush1.msra.mxu0 0.0
    %215 = vmatprep.subr.mxu0 0.0
    %216 = vmatpush1.msra.mxu0 0.0
    %217 = vmatprep.subr.mxu0 0.0
    %218 = vmatpush1.msra.mxu0 0.0
    %219 = vmatprep.subr.mxu0 0.0
    %220 = vmatpush1.msra.mxu0 0.0
    %221 = vmatprep.subr.mxu0 0.0
    %222 = vmatpush1.msra.mxu0 0.0
    %223 = vmatprep.subr.mxu0 0.0
    %224 = vmatpush1.msra.mxu0 0.0
    %225 = vmatprep.mubr.f32.mxu0 0.0
    %226 = vmatmul.mubr.f32.gmra.mrb[0].mxu0 %v150
    %v227 = vpop.f32.mrb[0].mxu0
    %v228 = vadd.f32 0.0, %v227
    %v229 = vpop.f32.mrb[0].mxu0
    %230 = vmatprep.mubr.f32.mxu0 0.0
    %231 = vmatmul.mubr.f32.gmra.mrb[0].mxu0 %v153
    %v232 = vpop.f32.mrb[0].mxu0
    %v233 = vadd.f32 0.0, %v232
    %v234 = vpop.f32.mrb[0].mxu0
    %235 = vmatprep.mubr.f32.mxu0 0.0
    %236 = vmatmul.mubr.f32.gmra.mrb[0].mxu0 %v156
    %v237 = vpop.f32.mrb[0].mxu0
    %v238 = vadd.f32 0.0, %v237
    %v239 = vpop.f32.mrb[0].mxu0
    %240 = vmatprep.mubr.f32.mxu0 0.0
    %241 = vmatmul.mubr.f32.gmra.mrb[0].mxu0 %v159
    %v242 = vpop.f32.mrb[0].mxu0
    %v243 = vadd.f32 0.0, %v242
    %v244 = vpop.f32.mrb[0].mxu0
    %245 = vdwg.mxu0
    %246 = vxpose.xlu0.b32.start [1/16] %v115, 128
    %247 = vxpose.xlu0.b32.cont [2/16] 0.0, 128
    %248 = vxpose.xlu0.b32.cont [3/16] 0.0, 128
    %249 = vxpose.xlu0.b32.cont [4/16] 0.0, 128
    %250 = vxpose.xlu0.b32.cont [5/16] 0.0, 128
    %251 = vxpose.xlu0.b32.cont [6/16] 0.0, 128
    %252 = vxpose.xlu0.b32.cont [7/16] 0.0, 128
    %253 = vxpose.xlu0.b32.cont [8/16] 0.0, 128
    %254 = vxpose.xlu0.b32.cont [9/16] 0.0, 128
    %255 = vxpose.xlu0.b32.cont [10/16] 0.0, 128
    %256 = vxpose.xlu0.b32.cont [11/16] 0.0, 128
    %257 = vxpose.xlu0.b32.cont [12/16] 0.0, 128
    %258 = vxpose.xlu0.b32.cont [13/16] 0.0, 128
    %259 = vxpose.xlu0.b32.cont [14/16] 0.0, 128
    %260 = vxpose.xlu0.b32.cont [15/16] 0.0, 128
    %261 = vxpose.xlu0.b32.end [16/16] 0.0, 128
    %v262 = vpop.trf.xlu0
    %v263 = vpop.trf.xlu0
    %v264 = vpop.trf.xlu0
    %v265 = vpop.trf.xlu0
    %v266 = vpop.trf.xlu0
    %v267 = vpop.trf.xlu0
    %v268 = vpop.trf.xlu0
    %v269 = vpop.trf.xlu0
    %v270 = vpop.trf.xlu0
    %v271 = vpop.trf.xlu0
    %v272 = vpop.trf.xlu0
    %v273 = vpop.trf.xlu0
    %v274 = vpop.trf.xlu0
    %v275 = vpop.trf.xlu0
    %v276 = vpop.trf.xlu0
    %v277 = vpop.trf.xlu0
    %v279 = vsel %vm148, %v262, 0
    %v282 = vsel %vm148, %v263, 0
    %v285 = vsel %vm148, %v264, 0
    %v288 = vsel %vm148, %v265, 0
    %290 = vmatprep.subr.mxu0 0.0
    %291 = vmatpush1.msra.mxu0 %v115
    %292 = vmatprep.subr.mxu0 0.0
    %293 = vmatpush1.msra.mxu0 0.0
    %294 = vmatprep.subr.mxu0 0.0
    %295 = vmatpush1.msra.mxu0 0.0
    %296 = vmatprep.subr.mxu0 0.0
    %297 = vmatpush1.msra.mxu0 0.0
    %298 = vmatprep.subr.mxu0 0.0
    %299 = vmatpush1.msra.mxu0 0.0
    %300 = vmatprep.subr.mxu0 0.0
    %301 = vmatpush1.msra.mxu0 0.0
    %302 = vmatprep.subr.mxu0 0.0
    %303 = vmatpush1.msra.mxu0 0.0
    %304 = vmatprep.subr.mxu0 0.0
    %305 = vmatpush1.msra.mxu0 0.0
    %306 = vmatprep.subr.mxu0 0.0
    %307 = vmatpush1.msra.mxu0 0.0
    %308 = vmatprep.subr.mxu0 0.0
    %309 = vmatpush1.msra.mxu0 0.0
    %310 = vmatprep.subr.mxu0 0.0
    %311 = vmatpush1.msra.mxu0 0.0
    %312 = vmatprep.subr.mxu0 0.0
    %313 = vmatpush1.msra.mxu0 0.0
    %314 = vmatprep.subr.mxu0 0.0
    %315 = vmatpush1.msra.mxu0 0.0
    %316 = vmatprep.subr.mxu0 0.0
    %317 = vmatpush1.msra.mxu0 0.0
    %318 = vmatprep.subr.mxu0 0.0
    %319 = vmatpush1.msra.mxu0 0.0
    %320 = vmatprep.subr.mxu0 0.0
    %321 = vmatpush1.msra.mxu0 0.0
    %322 = vmatprep.subr.mxu0 0.0
    %323 = vmatpush1.msra.mxu0 0.0
    %324 = vmatprep.subr.mxu0 0.0
    %325 = vmatpush1.msra.mxu0 0.0
    %326 = vmatprep.subr.mxu0 0.0
    %327 = vmatpush1.msra.mxu0 0.0
    %328 = vmatprep.subr.mxu0 0.0
    %329 = vmatpush1.msra.mxu0 0.0
    %330 = vmatprep.subr.mxu0 0.0
    %331 = vmatpush1.msra.mxu0 0.0
    %332 = vmatprep.subr.mxu0 0.0
    %333 = vmatpush1.msra.mxu0 0.0
    %334 = vmatprep.subr.mxu0 0.0
    %335 = vmatpush1.msra.mxu0 0.0
    %336 = vmatprep.subr.mxu0 0.0
    %337 = vmatpush1.msra.mxu0 0.0
    %338 = vmatprep.subr.mxu0 0.0
    %339 = vmatpush1.msra.mxu0 0.0
    %340 = vmatprep.subr.mxu0 0.0
    %341 = vmatpush1.msra.mxu0 0.0
    %342 = vmatprep.subr.mxu0 0.0
    %343 = vmatpush1.msra.mxu0 0.0
    %344 = vmatprep.subr.mxu0 0.0
    %345 = vmatpush1.msra.mxu0 0.0
    %346 = vmatprep.subr.mxu0 0.0
    %347 = vmatpush1.msra.mxu0 0.0
    %348 = vmatprep.subr.mxu0 0.0
    %349 = vmatpush1.msra.mxu0 0.0
    %350 = vmatprep.subr.mxu0 0.0
    %351 = vmatpush1.msra.mxu0 0.0
    %352 = vmatprep.subr.mxu0 0.0
    %353 = vmatpush1.msra.mxu0 0.0
    %354 = vmatprep.mubr.f32.mxu0 0.0
    %355 = vmatmul.mubr.f32.gmra.mrb[0].mxu0 %v279
    %v356 = vpop.f32.mrb[0].mxu0
    %v357 = vadd.f32 0.0, %v356
    %v358 = vpop.f32.mrb[0].mxu0
    %359 = vmatprep.mubr.f32.mxu0 0.0
    %360 = vmatmul.mubr.f32.gmra.mrb[0].mxu0 %v282
    %v361 = vpop.f32.mrb[0].mxu0
    %v362 = vadd.f32 0.0, %v361
    %v363 = vpop.f32.mrb[0].mxu0
    %364 = vmatprep.mubr.f32.mxu0 0.0
    %365 = vmatmul.mubr.f32.gmra.mrb[0].mxu0 %v285
    %v366 = vpop.f32.mrb[0].mxu0
    %v367 = vadd.f32 0.0, %v366
    %v368 = vpop.f32.mrb[0].mxu0
    %369 = vmatprep.mubr.f32.mxu0 0.0
    %370 = vmatmul.mubr.f32.gmra.mrb[0].mxu0 %v288
    %v371 = vpop.f32.mrb[0].mxu0
    %v372 = vadd.f32 0.0, %v371
    %v373 = vpop.f32.mrb[0].mxu0
    %374 = vdwg.mxu0
    %v376 = vsel %vm79, %v114, 0
    %378 = vmatprep.subr.mxu0 0.0
    %379 = vmatpush1.msra.mxu0 %v228
    %380 = vmatprep.subr.mxu0 0.0
    %381 = vmatpush1.msra.mxu0 %v233
    %382 = vmatprep.subr.mxu0 0.0
    %383 = vmatpush1.msra.mxu0 %v238
    %384 = vmatprep.subr.mxu0 0.0
    %385 = vmatpush1.msra.mxu0 %v243
    %386 = vmatprep.subr.mxu0 0.0
    %387 = vmatpush1.msra.mxu0 0.0
    %388 = vmatprep.subr.mxu0 0.0
    %389 = vmatpush1.msra.mxu0 0.0
    %390 = vmatprep.subr.mxu0 0.0
    %391 = vmatpush1.msra.mxu0 0.0
    %392 = vmatprep.subr.mxu0 0.0
    %393 = vmatpush1.msra.mxu0 0.0
    %394 = vmatprep.subr.mxu0 0.0
    %395 = vmatpush1.msra.mxu0 0.0
    %396 = vmatprep.subr.mxu0 0.0
    %397 = vmatpush1.msra.mxu0 0.0
    %398 = vmatprep.subr.mxu0 0.0
    %399 = vmatpush1.msra.mxu0 0.0
    %400 = vmatprep.subr.mxu0 0.0
    %401 = vmatpush1.msra.mxu0 0.0
    %402 = vmatprep.subr.mxu0 0.0
    %403 = vmatpush1.msra.mxu0 0.0
    %404 = vmatprep.subr.mxu0 0.0
    %405 = vmatpush1.msra.mxu0 0.0
    %406 = vmatprep.subr.mxu0 0.0
    %407 = vmatpush1.msra.mxu0 0.0
    %408 = vmatprep.subr.mxu0 0.0
    %409 = vmatpush1.msra.mxu0 0.0
    %410 = vmatprep.subr.mxu0 0.0
    %411 = vmatpush1.msra.mxu0 0.0
    %412 = vmatprep.subr.mxu0 0.0
    %413 = vmatpush1.msra.mxu0 0.0
    %414 = vmatprep.subr.mxu0 0.0
    %415 = vmatpush1.msra.mxu0 0.0
    %416 = vmatprep.subr.mxu0 0.0
    %417 = vmatpush1.msra.mxu0 0.0
    %418 = vmatprep.subr.mxu0 0.0
    %419 = vmatpush1.msra.mxu0 0.0
    %420 = vmatprep.subr.mxu0 0.0
    %421 = vmatpush1.msra.mxu0 0.0
    %422 = vmatprep.subr.mxu0 0.0
    %423 = vmatpush1.msra.mxu0 0.0
    %424 = vmatprep.subr.mxu0 0.0
    %425 = vmatpush1.msra.mxu0 0.0
    %426 = vmatprep.subr.mxu0 0.0
    %427 = vmatpush1.msra.mxu0 0.0
    %428 = vmatprep.subr.mxu0 0.0
    %429 = vmatpush1.msra.mxu0 0.0
    %430 = vmatprep.subr.mxu0 0.0
    %431 = vmatpush1.msra.mxu0 0.0
    %432 = vmatprep.subr.mxu0 0.0
    %433 = vmatpush1.msra.mxu0 0.0
    %434 = vmatprep.subr.mxu0 0.0
    %435 = vmatpush1.msra.mxu0 0.0
    %436 = vmatprep.subr.mxu0 0.0
    %437 = vmatpush1.msra.mxu0 0.0
    %438 = vmatprep.subr.mxu0 0.0
    %439 = vmatpush1.msra.mxu0 0.0
    %440 = vmatprep.subr.mxu0 0.0
    %441 = vmatpush1.msra.mxu0 0.0
    %442 = vmatprep.mubr.f32.mxu0 0.0
    %443 = vmatmul.mubr.f32.gmra.mrb[0].mxu0 %v376
    %v444 = vpop.f32.mrb[0].mxu0
    %v445 = vadd.f32 0.0, %v444
    %v446 = vpop.f32.mrb[0].mxu0
    %447 = vdwg.mxu0
    %v449 = vsel %vm79, %v115, 0
    %451 = vmatprep.subr.mxu0 0.0
    %452 = vmatpush1.msra.mxu0 %v357
    %453 = vmatprep.subr.mxu0 0.0
    %454 = vmatpush1.msra.mxu0 %v362
    %455 = vmatprep.subr.mxu0 0.0
    %456 = vmatpush1.msra.mxu0 %v367
    %457 = vmatprep.subr.mxu0 0.0
    %458 = vmatpush1.msra.mxu0 %v372
    %459 = vmatprep.subr.mxu0 0.0
    %460 = vmatpush1.msra.mxu0 0.0
    %461 = vmatprep.subr.mxu0 0.0
    %462 = vmatpush1.msra.mxu0 0.0
    %463 = vmatprep.subr.mxu0 0.0
    %464 = vmatpush1.msra.mxu0 0.0
    %465 = vmatprep.subr.mxu0 0.0
    %466 = vmatpush1.msra.mxu0 0.0
    %467 = vmatprep.subr.mxu0 0.0
    %468 = vmatpush1.msra.mxu0 0.0
    %469 = vmatprep.subr.mxu0 0.0
    %470 = vmatpush1.msra.mxu0 0.0
    %471 = vmatprep.subr.mxu0 0.0
    %472 = vmatpush1.msra.mxu0 0.0
    %473 = vmatprep.subr.mxu0 0.0
    %474 = vmatpush1.msra.mxu0 0.0
    %475 = vmatprep.subr.mxu0 0.0
    %476 = vmatpush1.msra.mxu0 0.0
    %477 = vmatprep.subr.mxu0 0.0
    %478 = vmatpush1.msra.mxu0 0.0
    %479 = vmatprep.subr.mxu0 0.0
    %480 = vmatpush1.msra.mxu0 0.0
    %481 = vmatprep.subr.mxu0 0.0
    %482 = vmatpush1.msra.mxu0 0.0
    %483 = vmatprep.subr.mxu0 0.0
    %484 = vmatpush1.msra.mxu0 0.0
    %485 = vmatprep.subr.mxu0 0.0
    %486 = vmatpush1.msra.mxu0 0.0
    %487 = vmatprep.subr.mxu0 0.0
    %488 = vmatpush1.msra.mxu0 0.0
    %489 = vmatprep.subr.mxu0 0.0
    %490 = vmatpush1.msra.mxu0 0.0
    %491 = vmatprep.subr.mxu0 0.0
    %492 = vmatpush1.msra.mxu0 0.0
    %493 = vmatprep.subr.mxu0 0.0
    %494 = vmatpush1.msra.mxu0 0.0
    %495 = vmatprep.subr.mxu0 0.0
    %496 = vmatpush1.msra.mxu0 0.0
    %497 = vmatprep.subr.mxu0 0.0
    %498 = vmatpush1.msra.mxu0 0.0
    %499 = vmatprep.subr.mxu0 0.0
    %500 = vmatpush1.msra.mxu0 0.0
    %501 = vmatprep.subr.mxu0 0.0
    %502 = vmatpush1.msra.mxu0 0.0
    %503 = vmatprep.subr.mxu0 0.0
    %504 = vmatpush1.msra.mxu0 0.0
    %505 = vmatprep.subr.mxu0 0.0
    %506 = vmatpush1.msra.mxu0 0.0
    %507 = vmatprep.subr.mxu0 0.0
    %508 = vmatpush1.msra.mxu0 0.0
    %509 = vmatprep.subr.mxu0 0.0
    %510 = vmatpush1.msra.mxu0 0.0
    %511 = vmatprep.subr.mxu0 0.0
    %512 = vmatpush1.msra.mxu0 0.0
    %513 = vmatprep.subr.mxu0 0.0
    %514 = vmatpush1.msra.mxu0 0.0
    %515 = vmatprep.mubr.f32.mxu0 0.0
    %516 = vmatmul.mubr.f32.gmra.mrb[0].mxu0 %v449
    %v517 = vpop.f32.mrb[0].mxu0
    %v518 = vadd.f32 0.0, %v517
    %v519 = vpop.f32.mrb[0].mxu0
    %520 = vdwg.mxu0
    %v521 = vld [vmem:[#allocation6] sm:$0xff]
    %v522 = vld [vmem:[#allocation6 + $0x8] sm:$0xff]
    %v523 = vld [vmem:[#allocation6 + $0x10] sm:$0xff]
    %v524 = vld [vmem:[#allocation6 + $0x18] sm:$0xff]
    %v525 = vld [vmem:[#allocation8] sm:$0xff]
    %v526 = vld [vmem:[#allocation8 + $0x8] sm:$0xff]
    %v527 = vld [vmem:[#allocation8 + $0x10] sm:$0xff]
    %v528 = vld [vmem:[#allocation8 + $0x18] sm:$0xff]
    %v530 = vsel %vm79, %v445, 0
    %v533 = vsel %vm79, %v518, 0
    %535 = vmatprep.subr.mxu0 0.0
    %536 = vmatpush1.msra.mxu0 %v525
    %537 = vmatprep.subr.mxu0 0.0
    %538 = vmatpush1.msra.mxu0 %v526
    %539 = vmatprep.subr.mxu0 0.0
    %540 = vmatpush1.msra.mxu0 %v527
    %541 = vmatprep.subr.mxu0 0.0
    %542 = vmatpush1.msra.mxu0 %v528
    %543 = vmatprep.subr.mxu0 0.0
    %544 = vmatpush1.msra.mxu0 0.0
    %545 = vmatprep.subr.mxu0 0.0
    %546 = vmatpush1.msra.mxu0 0.0
    %547 = vmatprep.subr.mxu0 0.0
    %548 = vmatpush1.msra.mxu0 0.0
    %549 = vmatprep.subr.mxu0 0.0
    %550 = vmatpush1.msra.mxu0 0.0
    %551 = vmatprep.subr.mxu0 0.0
    %552 = vmatpush1.msra.mxu0 0.0
    %553 = vmatprep.subr.mxu0 0.0
    %554 = vmatpush1.msra.mxu0 0.0
    %555 = vmatprep.subr.mxu0 0.0
    %556 = vmatpush1.msra.mxu0 0.0
    %557 = vmatprep.subr.mxu0 0.0
    %558 = vmatpush1.msra.mxu0 0.0
    %559 = vmatprep.subr.mxu0 0.0
    %560 = vmatpush1.msra.mxu0 0.0
    %561 = vmatprep.subr.mxu0 0.0
    %562 = vmatpush1.msra.mxu0 0.0
    %563 = vmatprep.subr.mxu0 0.0
    %564 = vmatpush1.msra.mxu0 0.0
    %565 = vmatprep.subr.mxu0 0.0
    %566 = vmatpush1.msra.mxu0 0.0
    %567 = vmatprep.subr.mxu0 0.0
    %568 = vmatpush1.msra.mxu0 0.0
    %569 = vmatprep.subr.mxu0 0.0
    %570 = vmatpush1.msra.mxu0 0.0
    %571 = vmatprep.subr.mxu0 0.0
    %572 = vmatpush1.msra.mxu0 0.0
    %573 = vmatprep.subr.mxu0 0.0
    %574 = vmatpush1.msra.mxu0 0.0
    %575 = vmatprep.subr.mxu0 0.0
    %576 = vmatpush1.msra.mxu0 0.0
    %577 = vmatprep.subr.mxu0 0.0
    %578 = vmatpush1.msra.mxu0 0.0
    %579 = vmatprep.subr.mxu0 0.0
    %580 = vmatpush1.msra.mxu0 0.0
    %581 = vmatprep.subr.mxu0 0.0
    %582 = vmatpush1.msra.mxu0 0.0
    %583 = vmatprep.subr.mxu0 0.0
    %584 = vmatpush1.msra.mxu0 0.0
    %585 = vmatprep.subr.mxu0 0.0
    %586 = vmatpush1.msra.mxu0 0.0
    %587 = vmatprep.subr.mxu0 0.0
    %588 = vmatpush1.msra.mxu0 0.0
    %589 = vmatprep.subr.mxu0 0.0
    %590 = vmatpush1.msra.mxu0 0.0
    %591 = vmatprep.subr.mxu0 0.0
    %592 = vmatpush1.msra.mxu0 0.0
    %593 = vmatprep.subr.mxu0 0.0
    %594 = vmatpush1.msra.mxu0 0.0
    %595 = vmatprep.subr.mxu0 0.0
    %596 = vmatpush1.msra.mxu0 0.0
    %597 = vmatprep.subr.mxu0 0.0
    %598 = vmatpush1.msra.mxu0 0.0
    %599 = vmatprep.mubr.f32.mxu0 0.0
    %600 = vmatmul.mubr.f32.gmra.mrb[0].mxu0 %v530
    %v601 = vpop.f32.mrb[0].mxu0
    %v602 = vadd.f32 0.0, %v601
    %v603 = vpop.f32.mrb[0].mxu0
    %604 = vmatprep.mubr.f32.mxu0 0.0
    %605 = vmatmul.mubr.f32.gmra.mrb[0].mxu0 %v533
    %v606 = vpop.f32.mrb[0].mxu0
    %v607 = vadd.f32 0.0, %v606
    %v608 = vpop.f32.mrb[0].mxu0
    %609 = vdwg.mxu0
    %v611 = vsel %vm79, %v75, 0
    %v614 = vsel %vm79, %v76, 0
    %616 = vmatprep.subr.mxu0 0.0
    %617 = vmatpush1.msra.mxu0 %v521
    %618 = vmatprep.subr.mxu0 0.0
    %619 = vmatpush1.msra.mxu0 %v522
    %620 = vmatprep.subr.mxu0 0.0
    %621 = vmatpush1.msra.mxu0 %v523
    %622 = vmatprep.subr.mxu0 0.0
    %623 = vmatpush1.msra.mxu0 %v524
    %624 = vmatprep.subr.mxu0 0.0
    %625 = vmatpush1.msra.mxu0 0.0
    %626 = vmatprep.subr.mxu0 0.0
    %627 = vmatpush1.msra.mxu0 0.0
    %628 = vmatprep.subr.mxu0 0.0
    %629 = vmatpush1.msra.mxu0 0.0
    %630 = vmatprep.subr.mxu0 0.0
    %631 = vmatpush1.msra.mxu0 0.0
    %632 = vmatprep.subr.mxu0 0.0
    %633 = vmatpush1.msra.mxu0 0.0
    %634 = vmatprep.subr.mxu0 0.0
    %635 = vmatpush1.msra.mxu0 0.0
    %636 = vmatprep.subr.mxu0 0.0
    %637 = vmatpush1.msra.mxu0 0.0
    %638 = vmatprep.subr.mxu0 0.0
    %639 = vmatpush1.msra.mxu0 0.0
    %640 = vmatprep.subr.mxu0 0.0
    %641 = vmatpush1.msra.mxu0 0.0
    %642 = vmatprep.subr.mxu0 0.0
    %643 = vmatpush1.msra.mxu0 0.0
    %644 = vmatprep.subr.mxu0 0.0
    %645 = vmatpush1.msra.mxu0 0.0
    %646 = vmatprep.subr.mxu0 0.0
    %647 = vmatpush1.msra.mxu0 0.0
    %648 = vmatprep.subr.mxu0 0.0
    %649 = vmatpush1.msra.mxu0 0.0
    %650 = vmatprep.subr.mxu0 0.0
    %651 = vmatpush1.msra.mxu0 0.0
    %652 = vmatprep.subr.mxu0 0.0
    %653 = vmatpush1.msra.mxu0 0.0
    %654 = vmatprep.subr.mxu0 0.0
    %655 = vmatpush1.msra.mxu0 0.0
    %656 = vmatprep.subr.mxu0 0.0
    %657 = vmatpush1.msra.mxu0 0.0
    %658 = vmatprep.subr.mxu0 0.0
    %659 = vmatpush1.msra.mxu0 0.0
    %660 = vmatprep.subr.mxu0 0.0
    %661 = vmatpush1.msra.mxu0 0.0
    %662 = vmatprep.subr.mxu0 0.0
    %663 = vmatpush1.msra.mxu0 0.0
    %664 = vmatprep.subr.mxu0 0.0
    %665 = vmatpush1.msra.mxu0 0.0
    %666 = vmatprep.subr.mxu0 0.0
    %667 = vmatpush1.msra.mxu0 0.0
    %668 = vmatprep.subr.mxu0 0.0
    %669 = vmatpush1.msra.mxu0 0.0
    %670 = vmatprep.subr.mxu0 0.0
    %671 = vmatpush1.msra.mxu0 0.0
    %672 = vmatprep.subr.mxu0 0.0
    %673 = vmatpush1.msra.mxu0 0.0
    %674 = vmatprep.subr.mxu0 0.0
    %675 = vmatpush1.msra.mxu0 0.0
    %676 = vmatprep.subr.mxu0 0.0
    %677 = vmatpush1.msra.mxu0 0.0
    %678 = vmatprep.subr.mxu0 0.0
    %679 = vmatpush1.msra.mxu0 0.0
    %680 = vmatprep.mubr.f32.mxu0 0.0
    %681 = vmatmul.mubr.f32.gmra.mrb[0].mxu0 %v611
    %v682 = vpop.f32.mrb[0].mxu0
    %v683 = vadd.f32 %v602, %v682
    %v684 = vpop.f32.mrb[0].mxu0
    %685 = vmatprep.mubr.f32.mxu0 0.0
    %686 = vmatmul.mubr.f32.gmra.mrb[0].mxu0 %v614
    %v687 = vpop.f32.mrb[0].mxu0
    %v688 = vadd.f32 %v607, %v687
    %v689 = vpop.f32.mrb[0].mxu0
    %690 = vdwg.mxu0
    %v691 = vld [vmem:[#allocation9] sm:$0x1]
    %v693 = vlaneseq
    %v694 = vshrl.u32 %v693, 7
    %v695 = vsub.s32 0, %v694
    %v696 = vrot.slane %v691, %v695
    %v698 = vadd.f32 %v683, %v696
    %v699 = vadd.f32 %v688, %v696
    %s700 = sld [smem:[#allocation2]]
    %vm701 = vcmp.gt.f32.partialorder %v698, 0.0
    %vm702 = vcmp.gt.f32.partialorder %v699, 0.0
    %v703 = vstv %s700
    %v704 = vmul.f32 %v703, %v698
    %v705 = vmul.f32 %v703, %v699
    %v706 = vsel %vm701, %v698, %v704
    %v707 = vsel %vm702, %v699, %v705
    %708 = vst.msk [vmem:[#allocation11] sm:$0xff] %vm79, %v706
    %709 = vst.msk [vmem:[#allocation11 + $0x8] sm:$0xff] %vm79, %v707
    // Predicated region
    $region38: #{tpu_custom_call.1} parent=1 // pred_check
      _
    $region39: #{tpu_custom_call.1} parent=1 // pred_check_branch
      %711 = sbr.rel (0) target = $region41
    $region40: #{tpu_custom_call.1} parent=1 // pred_region
      %s713 = ssub.s32 256, 256
      %714 = vsyncadd [#allocation5], %s713
      %s715 = sshll.u32 [#allocation11], 4
      %s716 = int_to_ptr.vmem [resolvable:$true] %s715
      %721 = dma.vmem_to_hbm [thread:$0]  %s716, 256, %s5, [#allocation5], 128, 128, 8
    $region41: #{tpu_custom_call.1} parent=1 // pred_fallthru
      _
    // Predicated region
    $region42: #{tpu_custom_call.1} parent=1 // pred_check
      _
    $region43: #{tpu_custom_call.1} parent=1 // pred_check_branch
      %723 = sbr.rel (0) target = $region45
    $region44: #{tpu_custom_call.1} parent=1 // pred_region
      %724 = dma.done [#allocation5], 256
    $region45: #{tpu_custom_call.1} parent=1 // pred_fallthru
      _
    %725 = vsyncpa [#allocation4], 1
    %726 = vsyncpa [#allocation7], 1
    %727 = vsyncpa [#allocation10], 1
    %728 = vsyncpa [#allocation5], 1

// kernel: tpu_custom_call.1
$region0: #{tpu_custom_call.1}
  #allocation0 [shape = 'u32[]', space=smem, size = 0x4, offset = 0x4, fixed_abs, tag = 'smem constant byte address 0x4 - core index']
  #allocation1 [shape = 'u32[144,128]{1,0:T(1,128)}', space=vmem, size = 0x12000, scoped, tag = 'internal scratch']
  #allocation2 [shape = 'f32[1]{0:T(128)S(6)}', space=smem, size = 0x200, scoped, tag = 'scoped memory for tpu_custom_call.1']
  %s0 = inlined_call_operand.hbm [shape: f32[2,8,32], index: 0, kind: input, shape index: {}]
  %s1 = inlined_call_operand.hbm [shape: f32[32,32], index: 1, kind: input, shape index: {}]
  %s2 = inlined_call_operand.hbm [shape: f32[32,32], index: 2, kind: input, shape index: {}]
  %s3 = inlined_call_operand.hbm [shape: f32[1,32], index: 3, kind: input, shape index: {}]
  %s4 = inlined_call_operand.<no memory space> [shape: f32[1], index: 4, kind: input, shape index: {}]
  %s5 = inlined_call_operand.hbm [shape: f32[2,8,32], index: 5, kind: output, shape index: {}]
  %s6 = sld [smem:[#allocation0]]
  $region46: #{tpu_custom_call.1} parent=0
    _
  %s8 = ssub.s32 1, %s6
  %s9 = scalar_select 0, %s8, %s6
  %10 = sst [smem:[#allocation2]] %s4
  $region1: #{tpu_custom_call.1} parent=0
    #allocation3 [shape = 'u8[8192]{0}', space=vmem, size = 0x2000, scoped, tag = 'input window, operand 0, single buffered']
    #allocation4 [shape = 's32[1]{0}', space=sflag, size = 0x4, scoped, tag = 'scoped memory for tpu_custom_call.1']
    #allocation5 [shape = 's32[1]{0}', space=sflag, size = 0x4, scoped, tag = 'scoped memory for tpu_custom_call.1']
    #allocation6 [shape = 'u8[16384]{0}', space=vmem, size = 0x4000, scoped, tag = 'input window, operand 1, single buffered']
    #allocation7 [shape = 's32[1]{0}', space=sflag, size = 0x4, scoped, tag = 'scoped memory for tpu_custom_call.1']
    #allocation8 [shape = 'u8[16384]{0}', space=vmem, size = 0x4000, scoped, tag = 'input window, operand 2, single buffered']
    #allocation9 [shape = 'u8[512]{0}', space=vmem, size = 0x400, scoped, tag = 'input window, operand 3, single buffered']
    #allocation10 [shape = 's32[1]{0}', space=sflag, size = 0x4, scoped, tag = 'scoped memory for tpu_custom_call.1']
    #allocation11 [shape = 'u8[8192]{0}', space=vmem, size = 0x2000, scoped, tag = 'output window, operand 0, single buffered']
    %11 = vsyncpa [#allocation4], 0
    %12 = vsyncpa [#allocation7], 0
    %13 = vsyncpa [#allocation10], 0
    %14 = vsyncpa [#allocation5], 0
    // Predicated region
    $region2: #{tpu_custom_call.1} parent=1 // pred_check
      _
    $region3: #{tpu_custom_call.1} parent=1 // pred_check_branch
      %16 = sbr.rel (0) target = $region5
    $region4: #{tpu_custom_call.1} parent=1 // pred_region
      %s18 = ssub.s32 256, 256
      %19 = vsyncadd [#allocation4], %s18
      %s20 = sshll.u32 [#allocation3], 4
      %s21 = int_to_ptr.vmem [resolvable:$true] %s20
      %26 = dma.hbm_to_vmem [thread:$0]  %s0, 256, %s21, [#allocation4], 128, 128, 8
    $region5: #{tpu_custom_call.1} parent=1 // pred_fallthru
      _
    // Predicated region
    $region6: #{tpu_custom_call.1} parent=1 // pred_check
      _
    $region7: #{tpu_custom_call.1} parent=1 // pred_check_branch
      %28 = sbr.rel (0) target = $region9
    $region8: #{tpu_custom_call.1} parent=1 // pred_region
      %s30 = ssub.s32 512, 512
      %31 = vsyncadd [#allocation7], %s30
      %s32 = sshll.u32 [#allocation6], 4
      %s33 = int_to_ptr.vmem [resolvable:$true] %s32
      %38 = dma.hbm_to_vmem [thread:$0]  %s1, 512, %s33, [#allocation7], 128, 128, 8
    $region9: #{tpu_custom_call.1} parent=1 // pred_fallthru
      _
    // Predicated region
    $region10: #{tpu_custom_call.1} parent=1 // pred_check
      _
    $region11: #{tpu_custom_call.1} parent=1 // pred_check_branch
      %40 = sbr.rel (0) target = $region13
    $region12: #{tpu_custom_call.1} parent=1 // pred_region
      %s42 = ssub.s32 512, 512
      %43 = vsyncadd [#allocation7], %s42
      %s44 = sshll.u32 [#allocation8], 4
      %s45 = int_to_ptr.vmem [resolvable:$true] %s44
      %50 = dma.hbm_to_vmem [thread:$0]  %s2, 512, %s45, [#allocation7], 128, 128, 8
    $region13: #{tpu_custom_call.1} parent=1 // pred_fallthru
      _
    // Predicated region
    $region14: #{tpu_custom_call.1} parent=1 // pred_check
      _
    $region15: #{tpu_custom_call.1} parent=1 // pred_check_branch
      %52 = sbr.rel (0) target = $region17
    $region16: #{tpu_custom_call.1} parent=1 // pred_region
      %s54 = ssub.s32 16, 16
      %55 = vsyncadd [#allocation10], %s54
      %s57 = sshll.u32 [#allocation9], 4
      %s58 = int_to_ptr.vmem [resolvable:$true] %s57
      %60 = dma.hbm_to_vmem [thread:$0]  %s3, 16, %s58, [#allocation10]
    $region17: #{tpu_custom_call.1} parent=1 // pred_fallthru
      _
    // Predicated region
    $region18: #{tpu_custom_call.1} parent=1 // pred_check
      _
    $region19: #{tpu_custom_call.1} parent=1 // pred_check_branch
      %62 = sbr.rel (0) target = $region21
    $region20: #{tpu_custom_call.1} parent=1 // pred_region
      _
    $region21: #{tpu_custom_call.1} parent=1 // pred_fallthru
      _
    // Predicated region
    $region22: #{tpu_custom_call.1} parent=1 // pred_check
      _
    $region23: #{tpu_custom_call.1} parent=1 // pred_check_branch
      %64 = sbr.rel (0) target = $region25
    $region24: #{tpu_custom_call.1} parent=1 // pred_region
      %65 = dma.done [#allocation4], 256
    $region25: #{tpu_custom_call.1} parent=1 // pred_fallthru
      _
    // Predicated region
    $region26: #{tpu_custom_call.1} parent=1 // pred_check
      _
    $region27: #{tpu_custom_call.1} parent=1 // pred_check_branch
      %67 = sbr.rel (0) target = $region29
    $region28: #{tpu_custom_call.1} parent=1 // pred_region
      %68 = dma.done [#allocation7], 512
    $region29: #{tpu_custom_call.1} parent=1 // pred_fallthru
      _
    // Predicated region
    $region30: #{tpu_custom_call.1} parent=1 // pred_check
      _
    $region31: #{tpu_custom_call.1} parent=1 // pred_check_branch
      %70 = sbr.rel (0) target = $region33
    $region32: #{tpu_custom_call.1} parent=1 // pred_region
      %71 = dma.done [#allocation7], 512
    $region33: #{tpu_custom_call.1} parent=1 // pred_fallthru
      _
    // Predicated region
    $region34: #{tpu_custom_call.1} parent=1 // pred_check
      _
    $region35: #{tpu_custom_call.1} parent=1 // pred_check_branch
      %73 = sbr.rel (0) target = $region37
    $region36: #{tpu_custom_call.1} parent=1 // pred_region
      %74 = dma.done [#allocation10], 16
    $region37: #{tpu_custom_call.1} parent=1 // pred_fallthru
      _
    %v75 = vld [vmem:[#allocation3] sm:$0xff]
    %v76 = vld [vmem:[#allocation3 + $0x8] sm:$0xff]
    %v77 = vmul.f32 %v75, %v75
    %v78 = vmul.f32 %v76, %v76
    %vm79 = vcmask 261120
    %v80 = vsel %vm79, %v77, 0.0
    %v81 = vrot.slane %v80, 4
    %v82 = vadd.f32 %v80, %v81
    %v83 = vrot.slane %v82, 2
    %v84 = vadd.f32 %v82, %v83
    %v85 = vrot.slane %v84, 1
    %v86 = vadd.f32 %v84, %v85
    %v87 = vsel %vm79, %v78, 0.0
    %v88 = vrot.slane %v87, 4
    %v89 = vadd.f32 %v87, %v88
    %v90 = vrot.slane %v89, 2
    %v91 = vadd.f32 %v89, %v90
    %v92 = vrot.slane %v91, 1
    %v93 = vadd.f32 %v91, %v92
    %v94 = vrsqrt.pop %v86
    %v95 = vmul.f32 %v86, %v94
    %vm96 = vcmp.eq.f32.partialorder %v86, inf
    %v97 = vsel %vm96, %v86, %v95
    %vm98 = vcmp.eq.f32.partialorder %v86, 0.0
    %v99 = vand.u32 %v86, 2147483648
    %v100 = vsel %vm98, %v99, %v97
    %v101 = vrsqrt.pop %v93
    %v102 = vmul.f32 %v93, %v101
    %vm103 = vcmp.eq.f32.partialorder %v93, inf
    %v104 = vsel %vm103, %v93, %v102
    %vm105 = vcmp.eq.f32.partialorder %v93, 0.0
    %v106 = vand.u32 %v93, 2147483648
    %v107 = vsel %vm105, %v106, %v104
    %v108 = vadd.f32 %v100, 1e-06
    %v109 = vadd.f32 %v107, 1e-06
    %v110 = vrcp.pop %v108
    %v111 = vmul.f32 1.0, %v110
    %v112 = vrcp.pop %v109
    %v113 = vmul.f32 1.0, %v112
    %v114 = vmul.f32 %v75, %v111
    %v115 = vmul.f32 %v76, %v113
    %116 = vxpose.xlu0.b32.start [1/16] %v114, 128
    %117 = vxpose.xlu0.b32.cont [2/16] 0.0, 128
    %118 = vxpose.xlu0.b32.cont [3/16] 0.0, 128
    %119 = vxpose.xlu0.b32.cont [4/16] 0.0, 128
    %120 = vxpose.xlu0.b32.cont [5/16] 0.0, 128
    %121 = vxpose.xlu0.b32.cont [6/16] 0.0, 128
    %122 = vxpose.xlu0.b32.cont [7/16] 0.0, 128
    %123 = vxpose.xlu0.b32.cont [8/16] 0.0, 128
    %124 = vxpose.xlu0.b32.cont [9/16] 0.0, 128
    %125 = vxpose.xlu0.b32.cont [10/16] 0.0, 128
    %126 = vxpose.xlu0.b32.cont [11/16] 0.0, 128
    %127 = vxpose.xlu0.b32.cont [12/16] 0.0, 128
    %128 = vxpose.xlu0.b32.cont [13/16] 0.0, 128
    %129 = vxpose.xlu0.b32.cont [14/16] 0.0, 128
    %130 = vxpose.xlu0.b32.cont [15/16] 0.0, 128
    %131 = vxpose.xlu0.b32.end [16/16] 0.0, 128
    %v132 = vpop.trf.xlu0
    %v133 = vpop.trf.xlu0
    %v134 = vpop.trf.xlu0
    %v135 = vpop.trf.xlu0
    %v136 = vpop.trf.xlu0
    %v137 = vpop.trf.xlu0
    %v138 = vpop.trf.xlu0
    %v139 = vpop.trf.xlu0
    %v140 = vpop.trf.xlu0
    %v141 = vpop.trf.xlu0
    %v142 = vpop.trf.xlu0
    %v143 = vpop.trf.xlu0
    %v144 = vpop.trf.xlu0
    %v145 = vpop.trf.xlu0
    %v146 = vpop.trf.xlu0
    %v147 = vpop.trf.xlu0
    %vm148 = vcmask 64512
    %v150 = vsel %vm148, %v132, 0
    %v153 = vsel %vm148, %v133, 0
    %v156 = vsel %vm148, %v134, 0
    %v159 = vsel %vm148, %v135, 0
    %161 = vmatprep.subr.mxu0 0.0
    %162 = vmatpush1.msra.mxu0 %v114
    %163 = vmatprep.subr.mxu0 0.0
    %164 = vmatpush1.msra.mxu0 0.0
    %165 = vmatprep.subr.mxu0 0.0
    %166 = vmatpush1.msra.mxu0 0.0
    %167 = vmatprep.subr.mxu0 0.0
    %168 = vmatpush1.msra.mxu0 0.0
    %169 = vmatprep.subr.mxu0 0.0
    %170 = vmatpush1.msra.mxu0 0.0
    %171 = vmatprep.subr.mxu0 0.0
    %172 = vmatpush1.msra.mxu0 0.0
    %173 = vmatprep.subr.mxu0 0.0
    %174 = vmatpush1.msra.mxu0 0.0
    %175 = vmatprep.subr.mxu0 0.0
    %176 = vmatpush1.msra.mxu0 0.0
    %177 = vmatprep.subr.mxu0 0.0
    %178 = vmatpush1.msra.mxu0 0.0
    %179 = vmatprep.subr.mxu0 0.0
    %180 = vmatpush1.msra.mxu0 0.0
    %181 = vmatprep.subr.mxu0 0.0
    %182 = vmatpush1.msra.mxu0 0.0
    %183 = vmatprep.subr.mxu0 0.0
    %184 = vmatpush1.msra.mxu0 0.0
    %185 = vmatprep.subr.mxu0 0.0
    %186 = vmatpush1.msra.mxu0 0.0
    %187 = vmatprep.subr.mxu0 0.0
    %188 = vmatpush1.msra.mxu0 0.0
    %189 = vmatprep.subr.mxu0 0.0
    %190 = vmatpush1.msra.mxu0 0.0
    %191 = vmatprep.subr.mxu0 0.0
    %192 = vmatpush1.msra.mxu0 0.0
    %193 = vmatprep.subr.mxu0 0.0
    %194 = vmatpush1.msra.mxu0 0.0
    %195 = vmatprep.subr.mxu0 0.0
    %196 = vmatpush1.msra.mxu0 0.0
    %197 = vmatprep.subr.mxu0 0.0
    %198 = vmatpush1.msra.mxu0 0.0
    %199 = vmatprep.subr.mxu0 0.0
    %200 = vmatpush1.msra.mxu0 0.0
    %201 = vmatprep.subr.mxu0 0.0
    %202 = vmatpush1.msra.mxu0 0.0
    %203 = vmatprep.subr.mxu0 0.0
    %204 = vmatpush1.msra.mxu0 0.0
    %205 = vmatprep.subr.mxu0 0.0
    %206 = vmatpush1.msra.mxu0 0.0
    %207 = vmatprep.subr.mxu0 0.0
    %208 = vmatpush1.msra.mxu0 0.0
    %209 = vmatprep.subr.mxu0 0.0
    %210 = vmatpush1.msra.mxu0 0.0
    %211 = vmatprep.subr.mxu0 0.0
    %212 = vmatpush1.msra.mxu0 0.0
    %213 = vmatprep.subr.mxu0 0.0
    %214 = vmatpush1.msra.mxu0 0.0
    %215 = vmatprep.subr.mxu0 0.0
    %216 = vmatpush1.msra.mxu0 0.0
    %217 = vmatprep.subr.mxu0 0.0
    %218 = vmatpush1.msra.mxu0 0.0
    %219 = vmatprep.subr.mxu0 0.0
    %220 = vmatpush1.msra.mxu0 0.0
    %221 = vmatprep.subr.mxu0 0.0
    %222 = vmatpush1.msra.mxu0 0.0
    %223 = vmatprep.subr.mxu0 0.0
    %224 = vmatpush1.msra.mxu0 0.0
    %225 = vmatprep.mubr.f32.mxu0 0.0
    %226 = vmatmul.mubr.f32.gmra.mrb[0].mxu0 %v150
    %v227 = vpop.f32.mrb[0].mxu0
    %v228 = vadd.f32 0.0, %v227
    %v229 = vpop.f32.mrb[0].mxu0
    %230 = vmatprep.mubr.f32.mxu0 0.0
    %231 = vmatmul.mubr.f32.gmra.mrb[0].mxu0 %v153
    %v232 = vpop.f32.mrb[0].mxu0
    %v233 = vadd.f32 0.0, %v232
    %v234 = vpop.f32.mrb[0].mxu0
    %235 = vmatprep.mubr.f32.mxu0 0.0
    %236 = vmatmul.mubr.f32.gmra.mrb[0].mxu0 %v156
    %v237 = vpop.f32.mrb[0].mxu0
    %v238 = vadd.f32 0.0, %v237
    %v239 = vpop.f32.mrb[0].mxu0
    %240 = vmatprep.mubr.f32.mxu0 0.0
    %241 = vmatmul.mubr.f32.gmra.mrb[0].mxu0 %v159
    %v242 = vpop.f32.mrb[0].mxu0
    %v243 = vadd.f32 0.0, %v242
    %v244 = vpop.f32.mrb[0].mxu0
    %245 = vdwg.mxu0
    %246 = vxpose.xlu0.b32.start [1/16] %v115, 128
    %247 = vxpose.xlu0.b32.cont [2/16] 0.0, 128
    %248 = vxpose.xlu0.b32.cont [3/16] 0.0, 128
    %249 = vxpose.xlu0.b32.cont [4/16] 0.0, 128
    %250 = vxpose.xlu0.b32.cont [5/16] 0.0, 128
    %251 = vxpose.xlu0.b32.cont [6/16] 0.0, 128
    %252 = vxpose.xlu0.b32.cont [7/16] 0.0, 128
    %253 = vxpose.xlu0.b32.cont [8/16] 0.0, 128
    %254 = vxpose.xlu0.b32.cont [9/16] 0.0, 128
    %255 = vxpose.xlu0.b32.cont [10/16] 0.0, 128
    %256 = vxpose.xlu0.b32.cont [11/16] 0.0, 128
    %257 = vxpose.xlu0.b32.cont [12/16] 0.0, 128
    %258 = vxpose.xlu0.b32.cont [13/16] 0.0, 128
    %259 = vxpose.xlu0.b32.cont [14/16] 0.0, 128
    %260 = vxpose.xlu0.b32.cont [15/16] 0.0, 128
    %261 = vxpose.xlu0.b32.end [16/16] 0.0, 128
    %v262 = vpop.trf.xlu0
    %v263 = vpop.trf.xlu0
    %v264 = vpop.trf.xlu0
    %v265 = vpop.trf.xlu0
    %v266 = vpop.trf.xlu0
    %v267 = vpop.trf.xlu0
    %v268 = vpop.trf.xlu0
    %v269 = vpop.trf.xlu0
    %v270 = vpop.trf.xlu0
    %v271 = vpop.trf.xlu0
    %v272 = vpop.trf.xlu0
    %v273 = vpop.trf.xlu0
    %v274 = vpop.trf.xlu0
    %v275 = vpop.trf.xlu0
    %v276 = vpop.trf.xlu0
    %v277 = vpop.trf.xlu0
    %v279 = vsel %vm148, %v262, 0
    %v282 = vsel %vm148, %v263, 0
    %v285 = vsel %vm148, %v264, 0
    %v288 = vsel %vm148, %v265, 0
    %290 = vmatprep.subr.mxu0 0.0
    %291 = vmatpush1.msra.mxu0 %v115
    %292 = vmatprep.subr.mxu0 0.0
    %293 = vmatpush1.msra.mxu0 0.0
    %294 = vmatprep.subr.mxu0 0.0
    %295 = vmatpush1.msra.mxu0 0.0
    %296 = vmatprep.subr.mxu0 0.0
    %297 = vmatpush1.msra.mxu0 0.0
    %298 = vmatprep.subr.mxu0 0.0
    %299 = vmatpush1.msra.mxu0 0.0
    %300 = vmatprep.subr.mxu0 0.0
    %301 = vmatpush1.msra.mxu0 0.0
    %302 = vmatprep.subr.mxu0 0.0
    %303 = vmatpush1.msra.mxu0 0.0
    %304 = vmatprep.subr.mxu0 0.0
    %305 = vmatpush1.msra.mxu0 0.0
    %306 = vmatprep.subr.mxu0 0.0
    %307 = vmatpush1.msra.mxu0 0.0
    %308 = vmatprep.subr.mxu0 0.0
    %309 = vmatpush1.msra.mxu0 0.0
    %310 = vmatprep.subr.mxu0 0.0
    %311 = vmatpush1.msra.mxu0 0.0
    %312 = vmatprep.subr.mxu0 0.0
    %313 = vmatpush1.msra.mxu0 0.0
    %314 = vmatprep.subr.mxu0 0.0
    %315 = vmatpush1.msra.mxu0 0.0
    %316 = vmatprep.subr.mxu0 0.0
    %317 = vmatpush1.msra.mxu0 0.0
    %318 = vmatprep.subr.mxu0 0.0
    %319 = vmatpush1.msra.mxu0 0.0
    %320 = vmatprep.subr.mxu0 0.0
    %321 = vmatpush1.msra.mxu0 0.0
    %322 = vmatprep.subr.mxu0 0.0
    %323 = vmatpush1.msra.mxu0 0.0
    %324 = vmatprep.subr.mxu0 0.0
    %325 = vmatpush1.msra.mxu0 0.0
    %326 = vmatprep.subr.mxu0 0.0
    %327 = vmatpush1.msra.mxu0 0.0
    %328 = vmatprep.subr.mxu0 0.0
    %329 = vmatpush1.msra.mxu0 0.0
    %330 = vmatprep.subr.mxu0 0.0
    %331 = vmatpush1.msra.mxu0 0.0
    %332 = vmatprep.subr.mxu0 0.0
    %333 = vmatpush1.msra.mxu0 0.0
    %334 = vmatprep.subr.mxu0 0.0
    %335 = vmatpush1.msra.mxu0 0.0
    %336 = vmatprep.subr.mxu0 0.0
    %337 = vmatpush1.msra.mxu0 0.0
    %338 = vmatprep.subr.mxu0 0.0
    %339 = vmatpush1.msra.mxu0 0.0
    %340 = vmatprep.subr.mxu0 0.0
    %341 = vmatpush1.msra.mxu0 0.0
    %342 = vmatprep.subr.mxu0 0.0
    %343 = vmatpush1.msra.mxu0 0.0
    %344 = vmatprep.subr.mxu0 0.0
    %345 = vmatpush1.msra.mxu0 0.0
    %346 = vmatprep.subr.mxu0 0.0
    %347 = vmatpush1.msra.mxu0 0.0
    %348 = vmatprep.subr.mxu0 0.0
    %349 = vmatpush1.msra.mxu0 0.0
    %350 = vmatprep.subr.mxu0 0.0
    %351 = vmatpush1.msra.mxu0 0.0
    %352 = vmatprep.subr.mxu0 0.0
    %353 = vmatpush1.msra.mxu0 0.0
    %354 = vmatprep.mubr.f32.mxu0 0.0
    %355 = vmatmul.mubr.f32.gmra.mrb[0].mxu0 %v279
    %v356 = vpop.f32.mrb[0].mxu0
    %v357 = vadd.f32 0.0, %v356
    %v358 = vpop.f32.mrb[0].mxu0
    %359 = vmatprep.mubr.f32.mxu0 0.0
    %360 = vmatmul.mubr.f32.gmra.mrb[0].mxu0 %v282
    %v361 = vpop.f32.mrb[0].mxu0
    %v362 = vadd.f32 0.0, %v361
    %v363 = vpop.f32.mrb[0].mxu0
    %364 = vmatprep.mubr.f32.mxu0 0.0
    %365 = vmatmul.mubr.f32.gmra.mrb[0].mxu0 %v285
    %v366 = vpop.f32.mrb[0].mxu0
    %v367 = vadd.f32 0.0, %v366
    %v368 = vpop.f32.mrb[0].mxu0
    %369 = vmatprep.mubr.f32.mxu0 0.0
    %370 = vmatmul.mubr.f32.gmra.mrb[0].mxu0 %v288
    %v371 = vpop.f32.mrb[0].mxu0
    %v372 = vadd.f32 0.0, %v371
    %v373 = vpop.f32.mrb[0].mxu0
    %374 = vdwg.mxu0
    %v376 = vsel %vm79, %v114, 0
    %378 = vmatprep.subr.mxu0 0.0
    %379 = vmatpush1.msra.mxu0 %v228
    %380 = vmatprep.subr.mxu0 0.0
    %381 = vmatpush1.msra.mxu0 %v233
    %382 = vmatprep.subr.mxu0 0.0
    %383 = vmatpush1.msra.mxu0 %v238
    %384 = vmatprep.subr.mxu0 0.0
    %385 = vmatpush1.msra.mxu0 %v243
    %386 = vmatprep.subr.mxu0 0.0
    %387 = vmatpush1.msra.mxu0 0.0
    %388 = vmatprep.subr.mxu0 0.0
    %389 = vmatpush1.msra.mxu0 0.0
    %390 = vmatprep.subr.mxu0 0.0
    %391 = vmatpush1.msra.mxu0 0.0
    %392 = vmatprep.subr.mxu0 0.0
    %393 = vmatpush1.msra.mxu0 0.0
    %394 = vmatprep.subr.mxu0 0.0
    %395 = vmatpush1.msra.mxu0 0.0
    %396 = vmatprep.subr.mxu0 0.0
    %397 = vmatpush1.msra.mxu0 0.0
    %398 = vmatprep.subr.mxu0 0.0
    %399 = vmatpush1.msra.mxu0 0.0
    %400 = vmatprep.subr.mxu0 0.0
    %401 = vmatpush1.msra.mxu0 0.0
    %402 = vmatprep.subr.mxu0 0.0
    %403 = vmatpush1.msra.mxu0 0.0
    %404 = vmatprep.subr.mxu0 0.0
    %405 = vmatpush1.msra.mxu0 0.0
    %406 = vmatprep.subr.mxu0 0.0
    %407 = vmatpush1.msra.mxu0 0.0
    %408 = vmatprep.subr.mxu0 0.0
    %409 = vmatpush1.msra.mxu0 0.0
    %410 = vmatprep.subr.mxu0 0.0
    %411 = vmatpush1.msra.mxu0 0.0
    %412 = vmatprep.subr.mxu0 0.0
    %413 = vmatpush1.msra.mxu0 0.0
    %414 = vmatprep.subr.mxu0 0.0
    %415 = vmatpush1.msra.mxu0 0.0
    %416 = vmatprep.subr.mxu0 0.0
    %417 = vmatpush1.msra.mxu0 0.0
    %418 = vmatprep.subr.mxu0 0.0
    %419 = vmatpush1.msra.mxu0 0.0
    %420 = vmatprep.subr.mxu0 0.0
    %421 = vmatpush1.msra.mxu0 0.0
    %422 = vmatprep.subr.mxu0 0.0
    %423 = vmatpush1.msra.mxu0 0.0
    %424 = vmatprep.subr.mxu0 0.0
    %425 = vmatpush1.msra.mxu0 0.0
    %426 = vmatprep.subr.mxu0 0.0
    %427 = vmatpush1.msra.mxu0 0.0
    %428 = vmatprep.subr.mxu0 0.0
    %429 = vmatpush1.msra.mxu0 0.0
    %430 = vmatprep.subr.mxu0 0.0
    %431 = vmatpush1.msra.mxu0 0.0
    %432 = vmatprep.subr.mxu0 0.0
    %433 = vmatpush1.msra.mxu0 0.0
    %434 = vmatprep.subr.mxu0 0.0
    %435 = vmatpush1.msra.mxu0 0.0
    %436 = vmatprep.subr.mxu0 0.0
    %437 = vmatpush1.msra.mxu0 0.0
    %438 = vmatprep.subr.mxu0 0.0
    %439 = vmatpush1.msra.mxu0 0.0
    %440 = vmatprep.subr.mxu0 0.0
    %441 = vmatpush1.msra.mxu0 0.0
    %442 = vmatprep.mubr.f32.mxu0 0.0
    %443 = vmatmul.mubr.f32.gmra.mrb[0].mxu0 %v376
    %v444 = vpop.f32.mrb[0].mxu0
    %v445 = vadd.f32 0.0, %v444
    %v446 = vpop.f32.mrb[0].mxu0
    %447 = vdwg.mxu0
    %v449 = vsel %vm79, %v115, 0
    %451 = vmatprep.subr.mxu0 0.0
    %452 = vmatpush1.msra.mxu0 %v357
    %453 = vmatprep.subr.mxu0 0.0
    %454 = vmatpush1.msra.mxu0 %v362
    %455 = vmatprep.subr.mxu0 0.0
    %456 = vmatpush1.msra.mxu0 %v367
    %457 = vmatprep.subr.mxu0 0.0
    %458 = vmatpush1.msra.mxu0 %v372
    %459 = vmatprep.subr.mxu0 0.0
    %460 = vmatpush1.msra.mxu0 0.0
    %461 = vmatprep.subr.mxu0 0.0
    %462 = vmatpush1.msra.mxu0 0.0
    %463 = vmatprep.subr.mxu0 0.0
    %464 = vmatpush1.msra.mxu0 0.0
    %465 = vmatprep.subr.mxu0 0.0
    %466 = vmatpush1.msra.mxu0 0.0
    %467 = vmatprep.subr.mxu0 0.0
    %468 = vmatpush1.msra.mxu0 0.0
    %469 = vmatprep.subr.mxu0 0.0
    %470 = vmatpush1.msra.mxu0 0.0
    %471 = vmatprep.subr.mxu0 0.0
    %472 = vmatpush1.msra.mxu0 0.0
    %473 = vmatprep.subr.mxu0 0.0
    %474 = vmatpush1.msra.mxu0 0.0
    %475 = vmatprep.subr.mxu0 0.0
    %476 = vmatpush1.msra.mxu0 0.0
    %477 = vmatprep.subr.mxu0 0.0
    %478 = vmatpush1.msra.mxu0 0.0
    %479 = vmatprep.subr.mxu0 0.0
    %480 = vmatpush1.msra.mxu0 0.0
    %481 = vmatprep.subr.mxu0 0.0
    %482 = vmatpush1.msra.mxu0 0.0
    %483 = vmatprep.subr.mxu0 0.0
    %484 = vmatpush1.msra.mxu0 0.0
    %485 = vmatprep.subr.mxu0 0.0
    %486 = vmatpush1.msra.mxu0 0.0
    %487 = vmatprep.subr.mxu0 0.0
    %488 = vmatpush1.msra.mxu0 0.0
    %489 = vmatprep.subr.mxu0 0.0
    %490 = vmatpush1.msra.mxu0 0.0
    %491 = vmatprep.subr.mxu0 0.0
    %492 = vmatpush1.msra.mxu0 0.0
    %493 = vmatprep.subr.mxu0 0.0
    %494 = vmatpush1.msra.mxu0 0.0
    %495 = vmatprep.subr.mxu0 0.0
    %496 = vmatpush1.msra.mxu0 0.0
    %497 = vmatprep.subr.mxu0 0.0
    %498 = vmatpush1.msra.mxu0 0.0
    %499 = vmatprep.subr.mxu0 0.0
    %500 = vmatpush1.msra.mxu0 0.0
    %501 = vmatprep.subr.mxu0 0.0
    %502 = vmatpush1.msra.mxu0 0.0
    %503 = vmatprep.subr.mxu0 0.0
    %504 = vmatpush1.msra.mxu0 0.0
    %505 = vmatprep.subr.mxu0 0.0
    %506 = vmatpush1.msra.mxu0 0.0
    %507 = vmatprep.subr.mxu0 0.0
    %508 = vmatpush1.msra.mxu0 0.0
    %509 = vmatprep.subr.mxu0 0.0
    %510 = vmatpush1.msra.mxu0 0.0
    %511 = vmatprep.subr.mxu0 0.0
    %512 = vmatpush1.msra.mxu0 0.0
    %513 = vmatprep.subr.mxu0 0.0
    %514 = vmatpush1.msra.mxu0 0.0
    %515 = vmatprep.mubr.f32.mxu0 0.0
    %516 = vmatmul.mubr.f32.gmra.mrb[0].mxu0 %v449
    %v517 = vpop.f32.mrb[0].mxu0
    %v518 = vadd.f32 0.0, %v517
    %v519 = vpop.f32.mrb[0].mxu0
    %520 = vdwg.mxu0
    %v521 = vld [vmem:[#allocation6] sm:$0xff]
    %v522 = vld [vmem:[#allocation6 + $0x8] sm:$0xff]
    %v523 = vld [vmem:[#allocation6 + $0x10] sm:$0xff]
    %v524 = vld [vmem:[#allocation6 + $0x18] sm:$0xff]
    %v525 = vld [vmem:[#allocation8] sm:$0xff]
    %v526 = vld [vmem:[#allocation8 + $0x8] sm:$0xff]
    %v527 = vld [vmem:[#allocation8 + $0x10] sm:$0xff]
    %v528 = vld [vmem:[#allocation8 + $0x18] sm:$0xff]
    %v530 = vsel %vm79, %v445, 0
    %v533 = vsel %vm79, %v518, 0
    %535 = vmatprep.subr.mxu0 0.0
    %536 = vmatpush1.msra.mxu0 %v525
    %537 = vmatprep.subr.mxu0 0.0
    %538 = vmatpush1.msra.mxu0 %v526
    %539 = vmatprep.subr.mxu0 0.0
    %540 = vmatpush1.msra.mxu0 %v527
    %541 = vmatprep.subr.mxu0 0.0
    %542 = vmatpush1.msra.mxu0 %v528
    %543 = vmatprep.subr.mxu0 0.0
    %544 = vmatpush1.msra.mxu0 0.0
    %545 = vmatprep.subr.mxu0 0.0
    %546 = vmatpush1.msra.mxu0 0.0
    %547 = vmatprep.subr.mxu0 0.0
    %548 = vmatpush1.msra.mxu0 0.0
    %549 = vmatprep.subr.mxu0 0.0
    %550 = vmatpush1.msra.mxu0 0.0
    %551 = vmatprep.subr.mxu0 0.0
    %552 = vmatpush1.msra.mxu0 0.0
    %553 = vmatprep.subr.mxu0 0.0
    %554 = vmatpush1.msra.mxu0 0.0
    %555 = vmatprep.subr.mxu0 0.0
    %556 = vmatpush1.msra.mxu0 0.0
    %557 = vmatprep.subr.mxu0 0.0
    %558 = vmatpush1.msra.mxu0 0.0
    %559 = vmatprep.subr.mxu0 0.0
    %560 = vmatpush1.msra.mxu0 0.0
    %561 = vmatprep.subr.mxu0 0.0
    %562 = vmatpush1.msra.mxu0 0.0
    %563 = vmatprep.subr.mxu0 0.0
    %564 = vmatpush1.msra.mxu0 0.0
    %565 = vmatprep.subr.mxu0 0.0
    %566 = vmatpush1.msra.mxu0 0.0
    %567 = vmatprep.subr.mxu0 0.0
    %568 = vmatpush1.msra.mxu0 0.0
    %569 = vmatprep.subr.mxu0 0.0
    %570 = vmatpush1.msra.mxu0 0.0
    %571 = vmatprep.subr.mxu0 0.0
    %572 = vmatpush1.msra.mxu0 0.0
    %573 = vmatprep.subr.mxu0 0.0
    %574 = vmatpush1.msra.mxu0 0.0
    %575 = vmatprep.subr.mxu0 0.0
    %576 = vmatpush1.msra.mxu0 0.0
    %577 = vmatprep.subr.mxu0 0.0
    %578 = vmatpush1.msra.mxu0 0.0
    %579 = vmatprep.subr.mxu0 0.0
    %580 = vmatpush1.msra.mxu0 0.0
    %581 = vmatprep.subr.mxu0 0.0
    %582 = vmatpush1.msra.mxu0 0.0
    %583 = vmatprep.subr.mxu0 0.0
    %584 = vmatpush1.msra.mxu0 0.0
    %585 = vmatprep.subr.mxu0 0.0
    %586 = vmatpush1.msra.mxu0 0.0
    %587 = vmatprep.subr.mxu0 0.0
    %588 = vmatpush1.msra.mxu0 0.0
    %589 = vmatprep.subr.mxu0 0.0
    %590 = vmatpush1.msra.mxu0 0.0
    %591 = vmatprep.subr.mxu0 0.0
    %592 = vmatpush1.msra.mxu0 0.0
    %593 = vmatprep.subr.mxu0 0.0
    %594 = vmatpush1.msra.mxu0 0.0
    %595 = vmatprep.subr.mxu0 0.0
    %596 = vmatpush1.msra.mxu0 0.0
    %597 = vmatprep.subr.mxu0 0.0
    %598 = vmatpush1.msra.mxu0 0.0
    %599 = vmatprep.mubr.f32.mxu0 0.0
    %600 = vmatmul.mubr.f32.gmra.mrb[0].mxu0 %v530
    %v601 = vpop.f32.mrb[0].mxu0
    %v602 = vadd.f32 0.0, %v601
    %v603 = vpop.f32.mrb[0].mxu0
    %604 = vmatprep.mubr.f32.mxu0 0.0
    %605 = vmatmul.mubr.f32.gmra.mrb[0].mxu0 %v533
    %v606 = vpop.f32.mrb[0].mxu0
    %v607 = vadd.f32 0.0, %v606
    %v608 = vpop.f32.mrb[0].mxu0
    %609 = vdwg.mxu0
    %v611 = vsel %vm79, %v75, 0
    %v614 = vsel %vm79, %v76, 0
    %616 = vmatprep.subr.mxu0 0.0
    %617 = vmatpush1.msra.mxu0 %v521
    %618 = vmatprep.subr.mxu0 0.0
    %619 = vmatpush1.msra.mxu0 %v522
    %620 = vmatprep.subr.mxu0 0.0
    %621 = vmatpush1.msra.mxu0 %v523
    %622 = vmatprep.subr.mxu0 0.0
    %623 = vmatpush1.msra.mxu0 %v524
    %624 = vmatprep.subr.mxu0 0.0
    %625 = vmatpush1.msra.mxu0 0.0
    %626 = vmatprep.subr.mxu0 0.0
    %627 = vmatpush1.msra.mxu0 0.0
    %628 = vmatprep.subr.mxu0 0.0
    %629 = vmatpush1.msra.mxu0 0.0
    %630 = vmatprep.subr.mxu0 0.0
    %631 = vmatpush1.msra.mxu0 0.0
    %632 = vmatprep.subr.mxu0 0.0
    %633 = vmatpush1.msra.mxu0 0.0
    %634 = vmatprep.subr.mxu0 0.0
    %635 = vmatpush1.msra.mxu0 0.0
    %636 = vmatprep.subr.mxu0 0.0
    %637 = vmatpush1.msra.mxu0 0.0
    %638 = vmatprep.subr.mxu0 0.0
    %639 = vmatpush1.msra.mxu0 0.0
    %640 = vmatprep.subr.mxu0 0.0
    %641 = vmatpush1.msra.mxu0 0.0
    %642 = vmatprep.subr.mxu0 0.0
    %643 = vmatpush1.msra.mxu0 0.0
    %644 = vmatprep.subr.mxu0 0.0
    %645 = vmatpush1.msra.mxu0 0.0
    %646 = vmatprep.subr.mxu0 0.0
    %647 = vmatpush1.msra.mxu0 0.0
    %648 = vmatprep.subr.mxu0 0.0
    %649 = vmatpush1.msra.mxu0 0.0
    %650 = vmatprep.subr.mxu0 0.0
    %651 = vmatpush1.msra.mxu0 0.0
    %652 = vmatprep.subr.mxu0 0.0
    %653 = vmatpush1.msra.mxu0 0.0
    %654 = vmatprep.subr.mxu0 0.0
    %655 = vmatpush1.msra.mxu0 0.0
    %656 = vmatprep.subr.mxu0 0.0
    %657 = vmatpush1.msra.mxu0 0.0
    %658 = vmatprep.subr.mxu0 0.0
    %659 = vmatpush1.msra.mxu0 0.0
    %660 = vmatprep.subr.mxu0 0.0
    %661 = vmatpush1.msra.mxu0 0.0
    %662 = vmatprep.subr.mxu0 0.0
    %663 = vmatpush1.msra.mxu0 0.0
    %664 = vmatprep.subr.mxu0 0.0
    %665 = vmatpush1.msra.mxu0 0.0
    %666 = vmatprep.subr.mxu0 0.0
    %667 = vmatpush1.msra.mxu0 0.0
    %668 = vmatprep.subr.mxu0 0.0
    %669 = vmatpush1.msra.mxu0 0.0
    %670 = vmatprep.subr.mxu0 0.0
    %671 = vmatpush1.msra.mxu0 0.0
    %672 = vmatprep.subr.mxu0 0.0
    %673 = vmatpush1.msra.mxu0 0.0
    %674 = vmatprep.subr.mxu0 0.0
    %675 = vmatpush1.msra.mxu0 0.0
    %676 = vmatprep.subr.mxu0 0.0
    %677 = vmatpush1.msra.mxu0 0.0
    %678 = vmatprep.subr.mxu0 0.0
    %679 = vmatpush1.msra.mxu0 0.0
    %680 = vmatprep.mubr.f32.mxu0 0.0
    %681 = vmatmul.mubr.f32.gmra.mrb[0].mxu0 %v611
    %v682 = vpop.f32.mrb[0].mxu0
    %v683 = vadd.f32 %v602, %v682
    %v684 = vpop.f32.mrb[0].mxu0
    %685 = vmatprep.mubr.f32.mxu0 0.0
    %686 = vmatmul.mubr.f32.gmra.mrb[0].mxu0 %v614
    %v687 = vpop.f32.mrb[0].mxu0
    %v688 = vadd.f32 %v607, %v687
    %v689 = vpop.f32.mrb[0].mxu0
    %690 = vdwg.mxu0
    %v691 = vld [vmem:[#allocation9] sm:$0x1]
    %v693 = vlaneseq
    %v694 = vshrl.u32 %v693, 7
    %v695 = vsub.s32 0, %v694
    %v696 = vrot.slane %v691, %v695
    %v698 = vadd.f32 %v683, %v696
    %v699 = vadd.f32 %v688, %v696
    %s700 = sld [smem:[#allocation2]]
    %vm701 = vcmp.gt.f32.partialorder %v698, 0.0
    %vm702 = vcmp.gt.f32.partialorder %v699, 0.0
    %v703 = vstv %s700
    %v704 = vmul.f32 %v703, %v698
    %v705 = vmul.f32 %v703, %v699
    %v706 = vsel %vm701, %v698, %v704
    %v707 = vsel %vm702, %v699, %v705
    %708 = vst.msk [vmem:[#allocation11] sm:$0xff] %vm79, %v706
    %709 = vst.msk [vmem:[#allocation11 + $0x8] sm:$0xff] %vm79, %v707
    // Predicated region
    $region38: #{tpu_custom_call.1} parent=1 // pred_check
      _
    $region39: #{tpu_custom_call.1} parent=1 // pred_check_branch
      %711 = sbr.rel (0) target = $region41
    $region40: #{tpu_custom_call.1} parent=1 // pred_region
      %s713 = ssub.s32 256, 256
      %714 = vsyncadd [#allocation5], %s713
      %s715 = sshll.u32 [#allocation11], 4
      %s716 = int_to_ptr.vmem [resolvable:$true] %s715
      %721 = dma.vmem_to_hbm [thread:$0]  %s716, 256, %s5, [#allocation5], 128, 128, 8
    $region41: #{tpu_custom_call.1} parent=1 // pred_fallthru
      _
    // Predicated region
    $region42: #{tpu_custom_call.1} parent=1 // pred_check
      _
    $region43: #{tpu_custom_call.1} parent=1 // pred_check_branch
      %723 = sbr.rel (0) target = $region45
    $region44: #{tpu_custom_call.1} parent=1 // pred_region
      %724 = dma.done [#allocation5], 256
    $region45: #{tpu_custom_call.1} parent=1 // pred_fallthru
      _
    %725 = vsyncpa [#allocation4], 1
    %726 = vsyncpa [#allocation7], 1
    %727 = vsyncpa [#allocation10], 1
    %728 = vsyncpa [#allocation5], 1

</llo_original>
